<compile_context>
chip_gen: v5e
topology: v5e:2x2
jax: 0.10.0
libtpu: 0.0.40
codegen_flags: <defaults>
</compile_context>

<pallas_src>
import math

import jax
import jax.numpy as jnp
from jax.experimental import pallas as pl
from jax.experimental.pallas import tpu as pltpu  # noqa: F401  (not needed by this kernel)

# ---- config (small, consistent with the module) ------------------------------
B = 2           # batch
N = 8           # number of graph nodes
D_EMBED = 32    # node embedding dim
D_E_EMBED = 16  # edge embedding dim
N_HEADS = 4
D_HEAD = D_EMBED // N_HEADS
LN_EPS = 1e-5

_PACK_COLS = 128  # lane width of both packed parameter arrays (full vreg lanes)


def _layer_norm(v, gamma, beta, eps):
    mu = jnp.mean(v, axis=-1, keepdims=True)
    var = jnp.mean(jnp.square(v - mu), axis=-1, keepdims=True)
    return (v - mu) * jax.lax.rsqrt(var + eps) * gamma + beta


def graph_attn_kernel(x_ref, e_ref, vec_ref, w_ref, out_x_ref, out_e_ref):
    # ---- whole-problem slabs (batch folded into rows) -------------------------
    x = x_ref[...]                    # (B*N, D)    = (16, 32)
    e = e_ref[...]                    # (B*N*N, De) = (128, 16)

    # ---- packed parameters (static slices, loaded once) -----------------------
    lnx_g = vec_ref[0:1, 0:D_EMBED]
    lnx_b = vec_ref[1:2, 0:D_EMBED]
    lne_g = vec_ref[2:3, 0:D_E_EMBED]
    lne_b = vec_ref[3:4, 0:D_E_EMBED]
    bqkv = vec_ref[4:5, 0:3 * D_EMBED]
    bo = vec_ref[5:6, 0:D_EMBED]
    beo = vec_ref[6:7, 0:D_E_EMBED]
    be = vec_ref[7:8, 0:N_HEADS]

    wqkv = w_ref[0:32, 0:3 * D_EMBED]    # (D, 3D)   fused q|k|v projection
    wo = w_ref[32:64, 0:D_EMBED]         # (D, D)    output projection
    gsc = w_ref[64:96, 0:N_HEADS]        # (D, H)    head-pool mask * 1/sqrt(Dh)
    we = w_ref[96:112, 0:N_HEADS]        # (De, H)   edge -> per-head bias
    gt = w_ref[112:116, 0:D_EMBED]       # (H, D)    head -> channel broadcast
    weo = w_ref[120:124, 0:D_E_EMBED]    # (H, De)   scores -> edge output

    # ---- node path: LN + fused QKV (one (16,32)@(32,96) matmul) ---------------
    x_ln = _layer_norm(x, lnx_g, lnx_b, LN_EPS)
    qkv = jnp.dot(x_ln, wqkv, preferred_element_type=jnp.float32) + bqkv   # (B*N, 3D)
    q = qkv[:, 0:D_EMBED]
    k = qkv[:, D_EMBED:2 * D_EMBED]
    v = qkv[:, 2 * D_EMBED:3 * D_EMBED]

    # ---- edge path: LN + per-head bias for the whole (B*N*N, De) slab ---------
    e_ln = _layer_norm(e, lne_g, lne_b, LN_EPS)
    e_bias = jnp.dot(e_ln, we, preferred_element_type=jnp.float32) + be    # (B*N*N, H)

    # ---- per-head scores for all (b, i, j) -------------------------------------
    # Static B=2 unroll of the per-batch outer product; this emits the same vreg
    # ops a rank-4 broadcast would, while keeping only lowering patterns already
    # proven to compile (3-D broadcast-mul, tile-aligned reshapes, concat).
    qk_blocks = []
    for b in range(B):
        qb = q[b * N:(b + 1) * N]                                          # (N, D)
        kb = k[b * N:(b + 1) * N]                                          # (N, D)
        qk_blocks.append((qb[:, None, :] * kb[None, :, :]).reshape(N * N, D_EMBED))
    qk = jnp.concatenate(qk_blocks, axis=0)                                # (B*N*N, D)
    s = jnp.dot(qk, gsc, preferred_element_type=jnp.float32) + e_bias      # (B*N*N, H)

    # ---- softmax over keys (axis j) --------------------------------------------
    s3 = s.reshape(B * N, N, N_HEADS)
    m = jnp.max(s3, axis=1, keepdims=True)
    p = jnp.exp(s3 - m)
    attn = (p / jnp.sum(p, axis=1, keepdims=True)).reshape(B * N * N, N_HEADS)

    # ---- context: broadcast head weights to channels, weight V, reduce keys ----
    attn_full = jnp.dot(attn, gt, preferred_element_type=jnp.float32)      # (B*N*N, D)
    ctx_blocks = []
    for b in range(B):
        af = attn_full[b * N * N:(b + 1) * N * N].reshape(N, N, D_EMBED)
        vb = v[b * N:(b + 1) * N]
        ctx_blocks.append(jnp.sum(af * vb[None, :, :], axis=1))            # (N, D)
    ctx = jnp.concatenate(ctx_blocks, axis=0)                              # (B*N, D)

    # ---- outputs: single slab stores, residuals on the raw inputs --------------
    out_x_ref[...] = jnp.dot(ctx, wo, preferred_element_type=jnp.float32) + bo + x
    out_e_ref[...] = jnp.dot(s, weo, preferred_element_type=jnp.float32) + beo + e


# ---- parameter packing (call ONCE at init time, not in the hot path) -----------
def pack_params(p):
    def row(vals):
        v = vals.reshape(1, -1)
        return jnp.pad(v, ((0, 0), (0, _PACK_COLS - v.shape[1])))

    vec = jnp.concatenate([
        row(p["lnx_g"]), row(p["lnx_b"]), row(p["lne_g"]), row(p["lne_b"]),
        row(jnp.concatenate([p["bq"], p["bk"], p["bv"]])),
        row(p["bo"]), row(p["beo"]), row(p["be"]),
    ], axis=0)                                                      # (8, 128)

    head_ids = jnp.arange(D_EMBED) // D_HEAD
    g_mat = (head_ids[:, None] == jnp.arange(N_HEADS)[None, :]).astype(jnp.float32)
    g_scaled = g_mat / math.sqrt(D_HEAD)   # fold 1/sqrt(Dh) into the head pooling
    gt_mat = g_mat.T

    def blk(w, rows):
        r, c = w.shape
        return jnp.pad(w, ((0, rows - r), (0, _PACK_COLS - c)))

    wpack = jnp.concatenate([
        blk(jnp.concatenate([p["wq"], p["wk"], p["wv"]], axis=1), 32),  # rows   0:32
        blk(p["wo"], 32),                                               # rows  32:64
        blk(g_scaled, 32),                                              # rows  64:96
        blk(p["we"], 16),                                               # rows  96:112
        blk(gt_mat, 8),                                                 # rows 112:120 (valid 112:116)
        blk(p["weo"], 8),                                               # rows 120:128 (valid 120:124)
    ], axis=0)                                                      # (128, 128)
    return vec, wpack


@jax.jit
def graph_attention_layer(x, e, vec, wpack):
    # Contiguous row-major reshapes: metadata-only under jit.
    x_rows = x.reshape(B * N, D_EMBED)
    e_rows = e.reshape(B * N * N, D_E_EMBED)

    # Single kernel invocation (no grid): whole arrays live in VMEM
    # (~100 KB total, orders of magnitude under any generation's VMEM).
    out_x_rows, out_e_rows = pl.pallas_call(
        graph_attn_kernel,
        out_shape=(
            jax.ShapeDtypeStruct((B * N, D_EMBED), jnp.float32),
            jax.ShapeDtypeStruct((B * N * N, D_E_EMBED), jnp.float32),
        ),
    )(x_rows, e_rows, vec, wpack)

    return (out_x_rows.reshape(B, N, D_EMBED),
            out_e_rows.reshape(B, N, N, D_E_EMBED))


def make_params(key):
    ks = jax.random.split(key, 16)
    s = 0.1
    return {
        "lnx_g": 1.0 + s * jax.random.normal(ks[0], (D_EMBED,), jnp.float32),
        "lnx_b": s * jax.random.normal(ks[1], (D_EMBED,), jnp.float32),
        "lne_g": 1.0 + s * jax.random.normal(ks[2], (D_E_EMBED,), jnp.float32),
        "lne_b": s * jax.random.normal(ks[3], (D_E_EMBED,), jnp.float32),
        "wq": s * jax.random.normal(ks[4], (D_EMBED, D_EMBED), jnp.float32),
        "bq": s * jax.random.normal(ks[5], (D_EMBED,), jnp.float32),
        "wk": s * jax.random.normal(ks[6], (D_EMBED, D_EMBED), jnp.float32),
        "bk": s * jax.random.normal(ks[7], (D_EMBED,), jnp.float32),
        "wv": s * jax.random.normal(ks[8], (D_EMBED, D_EMBED), jnp.float32),
        "bv": s * jax.random.normal(ks[9], (D_EMBED,), jnp.float32),
        "we": s * jax.random.normal(ks[10], (D_E_EMBED, N_HEADS), jnp.float32),
        "be": s * jax.random.normal(ks[11], (N_HEADS,), jnp.float32),
        "wo": s * jax.random.normal(ks[12], (D_EMBED, D_EMBED), jnp.float32),
        "bo": s * jax.random.normal(ks[13], (D_EMBED,), jnp.float32),
        "weo": s * jax.random.normal(ks[14], (N_HEADS, D_E_EMBED), jnp.float32),
        "beo": s * jax.random.normal(ks[15], (D_E_EMBED,), jnp.float32),
    }


def reference(x, e, p):
    def ln(v, g, b):
        mu = v.mean(-1, keepdims=True)
        var = ((v - mu) ** 2).mean(-1, keepdims=True)
        return (v - mu) / jnp.sqrt(var + LN_EPS) * g + b

    x_ln = ln(x, p["lnx_g"], p["lnx_b"])
    e_ln = ln(e, p["lne_g"], p["lne_b"])
    q = x_ln @ p["wq"] + p["bq"]
    k = x_ln @ p["wk"] + p["bk"]
    v = x_ln @ p["wv"] + p["bv"]
    qh = q.reshape(B, N, N_HEADS, D_HEAD)
    kh = k.reshape(B, N, N_HEADS, D_HEAD)
    vh = v.reshape(B, N, N_HEADS, D_HEAD)
    e_bias = e_ln @ p["we"] + p["be"]                            # (B,N,N,H)
    s = jnp.einsum("bihd,bjhd->bijh", qh, kh) / math.sqrt(D_HEAD) + e_bias
    attn = jax.nn.softmax(s, axis=2)
    ctx = jnp.einsum("bijh,bjhd->bihd", attn, vh).reshape(B, N, D_EMBED)
    out_x = ctx @ p["wo"] + p["bo"] + x
    out_e = s @ p["weo"] + p["beo"] + e
    return out_x, out_e


if __name__ == "__main__":
    key = jax.random.PRNGKey(0)
    kx, ke, kp = jax.random.split(key, 3)
    x = jax.random.normal(kx, (B, N, D_EMBED), jnp.float32)
    e = jax.random.normal(ke, (B, N, N, D_E_EMBED), jnp.float32)
    params = make_params(kp)

    # Packing hoisted out of the forward path: done once, reused per call.
    vec, wpack = pack_params(params)

    out_x, out_e = graph_attention_layer(x, e, vec, wpack)
    jax.block_until_ready((out_x, out_e))

    ref_x, ref_e = reference(x, e, params)
    assert out_x.shape == (B, N, D_EMBED) and out_e.shape == (B, N, N, D_E_EMBED)
    assert jnp.allclose(out_x, ref_x, atol=1e-4, rtol=1e-4)
    assert jnp.allclose(out_e, ref_e, atol=1e-4, rtol=1e-4)
    print("KERNEL_OK")
</pallas_src>

<mosaic_0001>
module attributes {stable_mosaic.version = 11 : i64} {
  func.func @graph_attn_kernel(%arg0: memref<16x32xf32, #tpu.memory_space<vmem>>, %arg1: memref<128x16xf32, #tpu.memory_space<vmem>>, %arg2: memref<8x128xf32, #tpu.memory_space<vmem>>, %arg3: memref<128x128xf32, #tpu.memory_space<vmem>>, %arg4: memref<16x32xf32, #tpu.memory_space<vmem>>, %arg5: memref<128x16xf32, #tpu.memory_space<vmem>>) attributes {dimension_semantics = [], scalar_prefetch = 0 : i64, scratch_operands = 0 : i64, tpu.core_type = #tpu.core_type<tc>} {
    %c0 = arith.constant 0 : index
    %c0_0 = arith.constant 0 : index
    %0 = vector.load %arg0[%c0, %c0_0] : memref<16x32xf32, #tpu.memory_space<vmem>>, vector<16x32xf32>
    %c0_1 = arith.constant 0 : index
    %c0_2 = arith.constant 0 : index
    %1 = vector.load %arg1[%c0_1, %c0_2] : memref<128x16xf32, #tpu.memory_space<vmem>>, vector<128x16xf32>
    %c0_3 = arith.constant 0 : index
    %c0_4 = arith.constant 0 : index
    %2 = vector.load %arg2[%c0_3, %c0_4] : memref<8x128xf32, #tpu.memory_space<vmem>>, vector<1x32xf32>
    %c1 = arith.constant 1 : index
    %c0_5 = arith.constant 0 : index
    %3 = vector.load %arg2[%c1, %c0_5] : memref<8x128xf32, #tpu.memory_space<vmem>>, vector<1x32xf32>
    %c2 = arith.constant 2 : index
    %c0_6 = arith.constant 0 : index
    %4 = vector.load %arg2[%c2, %c0_6] : memref<8x128xf32, #tpu.memory_space<vmem>>, vector<1x16xf32>
    %c3 = arith.constant 3 : index
    %c0_7 = arith.constant 0 : index
    %5 = vector.load %arg2[%c3, %c0_7] : memref<8x128xf32, #tpu.memory_space<vmem>>, vector<1x16xf32>
    %c4 = arith.constant 4 : index
    %c0_8 = arith.constant 0 : index
    %6 = vector.load %arg2[%c4, %c0_8] : memref<8x128xf32, #tpu.memory_space<vmem>>, vector<1x96xf32>
    %c5 = arith.constant 5 : index
    %c0_9 = arith.constant 0 : index
    %7 = vector.load %arg2[%c5, %c0_9] : memref<8x128xf32, #tpu.memory_space<vmem>>, vector<1x32xf32>
    %c6 = arith.constant 6 : index
    %c0_10 = arith.constant 0 : index
    %8 = vector.load %arg2[%c6, %c0_10] : memref<8x128xf32, #tpu.memory_space<vmem>>, vector<1x16xf32>
    %c7 = arith.constant 7 : index
    %c0_11 = arith.constant 0 : index
    %9 = vector.load %arg2[%c7, %c0_11] : memref<8x128xf32, #tpu.memory_space<vmem>>, vector<1x4xf32>
    %c0_12 = arith.constant 0 : index
    %c0_13 = arith.constant 0 : index
    %10 = vector.load %arg3[%c0_12, %c0_13] : memref<128x128xf32, #tpu.memory_space<vmem>>, vector<32x96xf32>
    %c32 = arith.constant 32 : index
    %c0_14 = arith.constant 0 : index
    %11 = vector.load %arg3[%c32, %c0_14] : memref<128x128xf32, #tpu.memory_space<vmem>>, vector<32x32xf32>
    %c64 = arith.constant 64 : index
    %c0_15 = arith.constant 0 : index
    %12 = vector.load %arg3[%c64, %c0_15] : memref<128x128xf32, #tpu.memory_space<vmem>>, vector<32x4xf32>
    %c96 = arith.constant 96 : index
    %c0_16 = arith.constant 0 : index
    %13 = vector.load %arg3[%c96, %c0_16] : memref<128x128xf32, #tpu.memory_space<vmem>>, vector<16x4xf32>
    %c112 = arith.constant 112 : index
    %c0_17 = arith.constant 0 : index
    %14 = vector.load %arg3[%c112, %c0_17] : memref<128x128xf32, #tpu.memory_space<vmem>>, vector<4x32xf32>
    %c120 = arith.constant 120 : index
    %c0_18 = arith.constant 0 : index
    %15 = vector.load %arg3[%c120, %c0_18] : memref<128x128xf32, #tpu.memory_space<vmem>>, vector<4x16xf32>
    %cst = arith.constant dense<0.000000e+00> : vector<16xf32>
    %16 = vector.multi_reduction <add>, %0, %cst [1] : vector<16x32xf32> to vector<16xf32>
    %17 = vector.shape_cast %16 : vector<16xf32> to vector<16x1xf32>
    %cst_19 = arith.constant 3.200000e+01 : f32
    %18 = vector.broadcast %cst_19 : f32 to vector<16x1xf32>
    %19 = arith.divf %17, %18 : vector<16x1xf32>
    %20 = vector.broadcast %19 : vector<16x1xf32> to vector<16x32xf32>
    %21 = arith.subf %0, %20 : vector<16x32xf32>
    %22 = arith.mulf %21, %21 : vector<16x32xf32>
    %cst_20 = arith.constant dense<0.000000e+00> : vector<16xf32>
    %23 = vector.multi_reduction <add>, %22, %cst_20 [1] : vector<16x32xf32> to vector<16xf32>
    %24 = vector.shape_cast %23 : vector<16xf32> to vector<16x1xf32>
    %cst_21 = arith.constant 3.200000e+01 : f32
    %25 = vector.broadcast %cst_21 : f32 to vector<16x1xf32>
    %26 = arith.divf %24, %25 : vector<16x1xf32>
    %27 = vector.broadcast %19 : vector<16x1xf32> to vector<16x32xf32>
    %28 = arith.subf %0, %27 : vector<16x32xf32>
    %cst_22 = arith.constant 9.99999974E-6 : f32
    %29 = vector.broadcast %cst_22 : f32 to vector<16x1xf32>
    %30 = arith.addf %26, %29 : vector<16x1xf32>
    %31 = math.rsqrt %30 : vector<16x1xf32>
    %32 = vector.broadcast %31 : vector<16x1xf32> to vector<16x32xf32>
    %33 = arith.mulf %28, %32 : vector<16x32xf32>
    %34 = vector.broadcast %2 : vector<1x32xf32> to vector<16x32xf32>
    %35 = arith.mulf %33, %34 : vector<16x32xf32>
    %36 = vector.broadcast %3 : vector<1x32xf32> to vector<16x32xf32>
    %37 = arith.addf %35, %36 : vector<16x32xf32>
    %cst_23 = arith.constant dense<0.000000e+00> : vector<16x96xf32>
    %38 = tpu.matmul %37, %10, %cst_23 {dimension_numbers = #tpu.dot_dimension_numbers<[1], [0], [0], [1], [0, 0, 1, 1], [], []>} : vector<16x32xf32>, vector<32x96xf32>, vector<16x96xf32> -> vector<16x96xf32>
    %39 = vector.broadcast %6 : vector<1x96xf32> to vector<16x96xf32>
    %40 = arith.addf %38, %39 : vector<16x96xf32>
    %41 = vector.extract_strided_slice %40 {offsets = [0, 0], sizes = [16, 32], strides = [1, 1]} : vector<16x96xf32> to vector<16x32xf32>
    %42 = vector.extract_strided_slice %40 {offsets = [0, 32], sizes = [16, 32], strides = [1, 1]} : vector<16x96xf32> to vector<16x32xf32>
    %43 = vector.extract_strided_slice %40 {offsets = [0, 64], sizes = [16, 32], strides = [1, 1]} : vector<16x96xf32> to vector<16x32xf32>
    %cst_24 = arith.constant dense<0.000000e+00> : vector<128xf32>
    %44 = vector.multi_reduction <add>, %1, %cst_24 [1] : vector<128x16xf32> to vector<128xf32>
    %45 = vector.shape_cast %44 : vector<128xf32> to vector<128x1xf32>
    %cst_25 = arith.constant 1.600000e+01 : f32
    %46 = vector.broadcast %cst_25 : f32 to vector<128x1xf32>
    %47 = arith.divf %45, %46 : vector<128x1xf32>
    %48 = vector.broadcast %47 : vector<128x1xf32> to vector<128x16xf32>
    %49 = arith.subf %1, %48 : vector<128x16xf32>
    %50 = arith.mulf %49, %49 : vector<128x16xf32>
    %cst_26 = arith.constant dense<0.000000e+00> : vector<128xf32>
    %51 = vector.multi_reduction <add>, %50, %cst_26 [1] : vector<128x16xf32> to vector<128xf32>
    %52 = vector.shape_cast %51 : vector<128xf32> to vector<128x1xf32>
    %cst_27 = arith.constant 1.600000e+01 : f32
    %53 = vector.broadcast %cst_27 : f32 to vector<128x1xf32>
    %54 = arith.divf %52, %53 : vector<128x1xf32>
    %55 = vector.broadcast %47 : vector<128x1xf32> to vector<128x16xf32>
    %56 = arith.subf %1, %55 : vector<128x16xf32>
    %cst_28 = arith.constant 9.99999974E-6 : f32
    %57 = vector.broadcast %cst_28 : f32 to vector<128x1xf32>
    %58 = arith.addf %54, %57 : vector<128x1xf32>
    %59 = math.rsqrt %58 : vector<128x1xf32>
    %60 = vector.broadcast %59 : vector<128x1xf32> to vector<128x16xf32>
    %61 = arith.mulf %56, %60 : vector<128x16xf32>
    %62 = vector.broadcast %4 : vector<1x16xf32> to vector<128x16xf32>
    %63 = arith.mulf %61, %62 : vector<128x16xf32>
    %64 = vector.broadcast %5 : vector<1x16xf32> to vector<128x16xf32>
    %65 = arith.addf %63, %64 : vector<128x16xf32>
    %cst_29 = arith.constant dense<0.000000e+00> : vector<128x4xf32>
    %66 = tpu.matmul %65, %13, %cst_29 {dimension_numbers = #tpu.dot_dimension_numbers<[1], [0], [0], [1], [0, 0, 1, 1], [], []>} : vector<128x16xf32>, vector<16x4xf32>, vector<128x4xf32> -> vector<128x4xf32>
    %67 = vector.broadcast %9 : vector<1x4xf32> to vector<128x4xf32>
    %68 = arith.addf %66, %67 : vector<128x4xf32>
    %69 = vector.extract_strided_slice %41 {offsets = [0, 0], sizes = [8, 32], strides = [1, 1]} : vector<16x32xf32> to vector<8x32xf32>
    %70 = vector.extract_strided_slice %42 {offsets = [0, 0], sizes = [8, 32], strides = [1, 1]} : vector<16x32xf32> to vector<8x32xf32>
    %71 = vector.shape_cast %69 : vector<8x32xf32> to vector<8x1x32xf32>
    %72 = vector.shape_cast %70 : vector<8x32xf32> to vector<1x8x32xf32>
    %73 = vector.broadcast %71 : vector<8x1x32xf32> to vector<8x8x32xf32>
    %74 = vector.broadcast %72 : vector<1x8x32xf32> to vector<8x8x32xf32>
    %75 = arith.mulf %73, %74 : vector<8x8x32xf32>
    %76 = vector.shape_cast %75 : vector<8x8x32xf32> to vector<64x32xf32>
    %77 = vector.extract_strided_slice %41 {offsets = [8, 0], sizes = [8, 32], strides = [1, 1]} : vector<16x32xf32> to vector<8x32xf32>
    %78 = vector.extract_strided_slice %42 {offsets = [8, 0], sizes = [8, 32], strides = [1, 1]} : vector<16x32xf32> to vector<8x32xf32>
    %79 = vector.shape_cast %77 : vector<8x32xf32> to vector<8x1x32xf32>
    %80 = vector.shape_cast %78 : vector<8x32xf32> to vector<1x8x32xf32>
    %81 = vector.broadcast %79 : vector<8x1x32xf32> to vector<8x8x32xf32>
    %82 = vector.broadcast %80 : vector<1x8x32xf32> to vector<8x8x32xf32>
    %83 = arith.mulf %81, %82 : vector<8x8x32xf32>
    %84 = vector.shape_cast %83 : vector<8x8x32xf32> to vector<64x32xf32>
    %85 = tpu.concatenate %76, %84 in 0 : vector<64x32xf32>, vector<64x32xf32> -> vector<128x32xf32>
    %cst_30 = arith.constant dense<0.000000e+00> : vector<128x4xf32>
    %86 = tpu.matmul %85, %12, %cst_30 {dimension_numbers = #tpu.dot_dimension_numbers<[1], [0], [0], [1], [0, 0, 1, 1], [], []>} : vector<128x32xf32>, vector<32x4xf32>, vector<128x4xf32> -> vector<128x4xf32>
    %87 = arith.addf %86, %68 : vector<128x4xf32>
    %88 = vector.shape_cast %87 : vector<128x4xf32> to vector<16x8x4xf32>
    %cst_31 = arith.constant dense<0xFF800000> : vector<16x4xf32>
    %89 = vector.multi_reduction <maximumf>, %88, %cst_31 [1] : vector<16x8x4xf32> to vector<16x4xf32>
    %90 = vector.shape_cast %89 : vector<16x4xf32> to vector<16x1x4xf32>
    %91 = vector.broadcast %90 : vector<16x1x4xf32> to vector<16x8x4xf32>
    %92 = arith.subf %88, %91 : vector<16x8x4xf32>
    %93 = math.exp %92 : vector<16x8x4xf32>
    %cst_32 = arith.constant dense<0.000000e+00> : vector<16x4xf32>
    %94 = vector.multi_reduction <add>, %93, %cst_32 [1] : vector<16x8x4xf32> to vector<16x4xf32>
    %95 = vector.shape_cast %94 : vector<16x4xf32> to vector<16x1x4xf32>
    %96 = vector.broadcast %95 : vector<16x1x4xf32> to vector<16x8x4xf32>
    %97 = arith.divf %93, %96 : vector<16x8x4xf32>
    %98 = vector.shape_cast %97 : vector<16x8x4xf32> to vector<128x4xf32>
    %cst_33 = arith.constant dense<0.000000e+00> : vector<128x32xf32>
    %99 = tpu.matmul %98, %14, %cst_33 {dimension_numbers = #tpu.dot_dimension_numbers<[1], [0], [0], [1], [0, 0, 1, 1], [], []>} : vector<128x4xf32>, vector<4x32xf32>, vector<128x32xf32> -> vector<128x32xf32>
    %100 = vector.extract_strided_slice %99 {offsets = [0, 0], sizes = [64, 32], strides = [1, 1]} : vector<128x32xf32> to vector<64x32xf32>
    %101 = vector.shape_cast %100 : vector<64x32xf32> to vector<8x8x32xf32>
    %102 = vector.extract_strided_slice %43 {offsets = [0, 0], sizes = [8, 32], strides = [1, 1]} : vector<16x32xf32> to vector<8x32xf32>
    %103 = vector.shape_cast %102 : vector<8x32xf32> to vector<1x8x32xf32>
    %104 = vector.broadcast %103 : vector<1x8x32xf32> to vector<8x8x32xf32>
    %105 = arith.mulf %101, %104 : vector<8x8x32xf32>
    %cst_34 = arith.constant dense<0.000000e+00> : vector<8x32xf32>
    %106 = vector.multi_reduction <add>, %105, %cst_34 [1] : vector<8x8x32xf32> to vector<8x32xf32>
    %107 = vector.extract_strided_slice %99 {offsets = [64, 0], sizes = [64, 32], strides = [1, 1]} : vector<128x32xf32> to vector<64x32xf32>
    %108 = vector.shape_cast %107 : vector<64x32xf32> to vector<8x8x32xf32>
    %109 = vector.extract_strided_slice %43 {offsets = [8, 0], sizes = [8, 32], strides = [1, 1]} : vector<16x32xf32> to vector<8x32xf32>
    %110 = vector.shape_cast %109 : vector<8x32xf32> to vector<1x8x32xf32>
    %111 = vector.broadcast %110 : vector<1x8x32xf32> to vector<8x8x32xf32>
    %112 = arith.mulf %108, %111 : vector<8x8x32xf32>
    %cst_35 = arith.constant dense<0.000000e+00> : vector<8x32xf32>
    %113 = vector.multi_reduction <add>, %112, %cst_35 [1] : vector<8x8x32xf32> to vector<8x32xf32>
    %114 = tpu.concatenate %106, %113 in 0 : vector<8x32xf32>, vector<8x32xf32> -> vector<16x32xf32>
    %cst_36 = arith.constant dense<0.000000e+00> : vector<16x32xf32>
    %115 = tpu.matmul %114, %11, %cst_36 {dimension_numbers = #tpu.dot_dimension_numbers<[1], [0], [0], [1], [0, 0, 1, 1], [], []>} : vector<16x32xf32>, vector<32x32xf32>, vector<16x32xf32> -> vector<16x32xf32>
    %116 = vector.broadcast %7 : vector<1x32xf32> to vector<16x32xf32>
    %117 = arith.addf %115, %116 : vector<16x32xf32>
    %118 = arith.addf %117, %0 : vector<16x32xf32>
    %c0_37 = arith.constant 0 : index
    %c0_38 = arith.constant 0 : index
    %119 = vector.load %arg4[%c0_37, %c0_38] : memref<16x32xf32, #tpu.memory_space<vmem>>, vector<16x32xf32>
    tpu.vector_store %arg4[%c0_37, %c0_38], %118 {strides = array<i32>} : memref<16x32xf32, #tpu.memory_space<vmem>>, vector<16x32xf32>,
    %cst_39 = arith.constant dense<0.000000e+00> : vector<128x16xf32>
    %120 = tpu.matmul %87, %15, %cst_39 {dimension_numbers = #tpu.dot_dimension_numbers<[1], [0], [0], [1], [0, 0, 1, 1], [], []>} : vector<128x4xf32>, vector<4x16xf32>, vector<128x16xf32> -> vector<128x16xf32>
    %121 = vector.broadcast %8 : vector<1x16xf32> to vector<128x16xf32>
    %122 = arith.addf %120, %121 : vector<128x16xf32>
    %123 = arith.addf %122, %1 : vector<128x16xf32>
    %c0_40 = arith.constant 0 : index
    %c0_41 = arith.constant 0 : index
    %124 = vector.load %arg5[%c0_40, %c0_41] : memref<128x16xf32, #tpu.memory_space<vmem>>, vector<128x16xf32>
    tpu.vector_store %arg5[%c0_40, %c0_41], %123 {strides = array<i32>} : memref<128x16xf32, #tpu.memory_space<vmem>>, vector<128x16xf32>,
    return
  }
}

</mosaic_0001>

<llo_original>
// kernel: graph_attention_layer.1
$region0: #{graph_attention_layer.1}
  #allocation0 [shape = 'u32[]', space=smem, size = 0x4, offset = 0x4, fixed_abs, tag = 'smem constant byte address 0x4 - core index']
  #allocation1 [shape = 'u32[72,128]{1,0:T(1,128)}', space=vmem, size = 0x9000, scoped, tag = 'internal scratch']
  %s0 = inlined_call_operand.hbm [shape: f32[16,32], index: 0, kind: input, shape index: {}]
  %s1 = inlined_call_operand.hbm [shape: f32[128,16], index: 1, kind: input, shape index: {}]
  %s2 = inlined_call_operand.hbm [shape: f32[8,128], index: 2, kind: input, shape index: {}]
  %s3 = inlined_call_operand.hbm [shape: f32[128,128], index: 3, kind: input, shape index: {}]
  %s4 = inlined_call_operand.hbm [shape: f32[16,32], index: 4, kind: output, shape index: {0}]
  %s5 = inlined_call_operand.hbm [shape: f32[128,16], index: 5, kind: output, shape index: {1}]
  %6 = xla_tuple %s4, %s5
  %s7 = sld [smem:[#allocation0]]
  $region50: #{graph_attention_layer.1} parent=0
    _
  %s9 = ssub.s32 1, %s7
  %s10 = scalar_select 0, %s9, %s7
  $region1: #{graph_attention_layer.1} parent=0
    #allocation2 [shape = 'u8[8192]{0}', space=vmem, size = 0x2000, scoped, tag = 'input window, operand 0, single buffered']
    #allocation3 [shape = 's32[1]{0}', space=sflag, size = 0x4, scoped, tag = 'scoped memory for graph_attention_layer.1']
    #allocation4 [shape = 's32[1]{0}', space=sflag, size = 0x4, scoped, tag = 'scoped memory for graph_attention_layer.1']
    #allocation5 [shape = 'u8[65536]{0}', space=vmem, size = 0x10000, scoped, tag = 'input window, operand 1, single buffered']
    #allocation6 [shape = 's32[1]{0}', space=sflag, size = 0x4, scoped, tag = 'scoped memory for graph_attention_layer.1']
    #allocation7 [shape = 'u8[4096]{0}', space=vmem, size = 0x1000, scoped, tag = 'input window, operand 2, single buffered']
    #allocation8 [shape = 'u8[65536]{0}', space=vmem, size = 0x10000, scoped, tag = 'input window, operand 3, single buffered']
    #allocation9 [shape = 's32[1]{0}', space=sflag, size = 0x4, scoped, tag = 'scoped memory for graph_attention_layer.1']
    #allocation10 [shape = 'u8[8192]{0}', space=vmem, size = 0x2000, scoped, tag = 'output window, operand 0, single buffered']
    #allocation11 [shape = 'u8[65536]{0}', space=vmem, size = 0x10000, scoped, tag = 'output window, operand 1, single buffered']
    #allocation12 [shape = 's32[1]{0}', space=sflag, size = 0x4, scoped, tag = 'scoped memory for graph_attention_layer.1']
    %11 = vsyncpa [#allocation3], 0
    %12 = vsyncpa [#allocation6], 0
    %13 = vsyncpa [#allocation9], 0
    %14 = vsyncpa [#allocation4], 0
    %15 = vsyncpa [#allocation12], 0
    // Predicated region
    $region2: #{graph_attention_layer.1} parent=1 // pred_check
      _
    $region3: #{graph_attention_layer.1} parent=1 // pred_check_branch
      %17 = sbr.rel (0) target = $region5
    $region4: #{graph_attention_layer.1} parent=1 // pred_region
      %19 = vsyncadd [#allocation3], 0
      %s20 = sshll.u32 %s0, 4
      %s21 = int_to_ptr.hbm [resolvable:$true] %s20
      %s22 = sshll.u32 [#allocation2], 4
      %s23 = int_to_ptr.vmem [resolvable:$true] %s22
      %28 = dma.hbm_to_vmem [thread:$0]  %s21, 256, %s23, [#allocation3], 128, 128, 8
    $region5: #{graph_attention_layer.1} parent=1 // pred_fallthru
      _
    // Predicated region
    $region6: #{graph_attention_layer.1} parent=1 // pred_check
      _
    $region7: #{graph_attention_layer.1} parent=1 // pred_check_branch
      %30 = sbr.rel (0) target = $region9
    $region8: #{graph_attention_layer.1} parent=1 // pred_region
      %32 = vsyncadd [#allocation6], 0
      %s33 = sshll.u32 %s1, 4
      %s34 = int_to_ptr.hbm [resolvable:$true] %s33
      %s35 = sshll.u32 [#allocation5], 4
      %s36 = int_to_ptr.vmem [resolvable:$true] %s35
      %41 = dma.hbm_to_vmem [thread:$0]  %s34, 2048, %s36, [#allocation6], 128, 128, 8
    $region9: #{graph_attention_layer.1} parent=1 // pred_fallthru
      _
    // Predicated region
    $region10: #{graph_attention_layer.1} parent=1 // pred_check
      _
    $region11: #{graph_attention_layer.1} parent=1 // pred_check_branch
      %43 = sbr.rel (0) target = $region13
    $region12: #{graph_attention_layer.1} parent=1 // pred_region
      %45 = vsyncadd [#allocation6], 0
      %s47 = sshll.u32 %s2, 4
      %s48 = int_to_ptr.hbm [resolvable:$true] %s47
      %s49 = sshll.u32 [#allocation7], 4
      %s50 = int_to_ptr.vmem [resolvable:$true] %s49
      %52 = dma.hbm_to_vmem [thread:$0]  %s48, 128, %s50, [#allocation6]
    $region13: #{graph_attention_layer.1} parent=1 // pred_fallthru
      _
    // Predicated region
    $region14: #{graph_attention_layer.1} parent=1 // pred_check
      _
    $region15: #{graph_attention_layer.1} parent=1 // pred_check_branch
      %54 = sbr.rel (0) target = $region17
    $region16: #{graph_attention_layer.1} parent=1 // pred_region
      %56 = vsyncadd [#allocation9], 0
      %s57 = sshll.u32 %s3, 4
      %s58 = int_to_ptr.hbm [resolvable:$true] %s57
      %s59 = sshll.u32 [#allocation8], 4
      %s60 = int_to_ptr.vmem [resolvable:$true] %s59
      %65 = dma.hbm_to_vmem [thread:$0]  %s58, 2048, %s60, [#allocation9], 128, 128, 8
    $region17: #{graph_attention_layer.1} parent=1 // pred_fallthru
      _
    // Predicated region
    $region18: #{graph_attention_layer.1} parent=1 // pred_check
      _
    $region19: #{graph_attention_layer.1} parent=1 // pred_check_branch
      %67 = sbr.rel (0) target = $region21
    $region20: #{graph_attention_layer.1} parent=1 // pred_region
      %69 = dma.done [#allocation3], 256
    $region21: #{graph_attention_layer.1} parent=1 // pred_fallthru
      _
    // Predicated region
    $region22: #{graph_attention_layer.1} parent=1 // pred_check
      _
    $region23: #{graph_attention_layer.1} parent=1 // pred_check_branch
      %71 = sbr.rel (0) target = $region25
    $region24: #{graph_attention_layer.1} parent=1 // pred_region
      %73 = dma.done [#allocation6], 2048
    $region25: #{graph_attention_layer.1} parent=1 // pred_fallthru
      _
    // Predicated region
    $region26: #{graph_attention_layer.1} parent=1 // pred_check
      _
    $region27: #{graph_attention_layer.1} parent=1 // pred_check_branch
      %75 = sbr.rel (0) target = $region29
    $region28: #{graph_attention_layer.1} parent=1 // pred_region
      %77 = dma.done [#allocation6], 128
    $region29: #{graph_attention_layer.1} parent=1 // pred_fallthru
      _
    // Predicated region
    $region30: #{graph_attention_layer.1} parent=1 // pred_check
      _
    $region31: #{graph_attention_layer.1} parent=1 // pred_check_branch
      %79 = sbr.rel (0) target = $region33
    $region32: #{graph_attention_layer.1} parent=1 // pred_region
      %81 = dma.done [#allocation9], 2048
    $region33: #{graph_attention_layer.1} parent=1 // pred_fallthru
      _
    %v82 = vld [vmem:[#allocation2] sm:$0xff]
    %v83 = vld [vmem:[#allocation2 + $0x8] sm:$0xff]
    %v84 = vld [vmem:[#allocation5] sm:$0xff]
    %v85 = vld [vmem:[#allocation5 + $0x8] sm:$0xff]
    %v86 = vld [vmem:[#allocation5 + $0x10] sm:$0xff]
    %v87 = vld [vmem:[#allocation5 + $0x18] sm:$0xff]
    %v88 = vld [vmem:[#allocation5 + $0x20] sm:$0xff]
    %v89 = vld [vmem:[#allocation5 + $0x28] sm:$0xff]
    %v90 = vld [vmem:[#allocation5 + $0x30] sm:$0xff]
    %v91 = vld [vmem:[#allocation5 + $0x38] sm:$0xff]
    %v92 = vld [vmem:[#allocation5 + $0x40] sm:$0xff]
    %v93 = vld [vmem:[#allocation5 + $0x48] sm:$0xff]
    %v94 = vld [vmem:[#allocation5 + $0x50] sm:$0xff]
    %v95 = vld [vmem:[#allocation5 + $0x58] sm:$0xff]
    %v96 = vld [vmem:[#allocation5 + $0x60] sm:$0xff]
    %v97 = vld [vmem:[#allocation5 + $0x68] sm:$0xff]
    %v98 = vld [vmem:[#allocation5 + $0x70] sm:$0xff]
    %v99 = vld [vmem:[#allocation5 + $0x78] sm:$0xff]
    %v100 = vld [vmem:[#allocation7] sm:$0x1]
    %v101 = vld [vmem:[#allocation7 + $0x1] sm:$0x1]
    %v102 = vld [vmem:[#allocation7 + $0x2] sm:$0x1]
    %v103 = vld [vmem:[#allocation7 + $0x3] sm:$0x1]
    %v104 = vld [vmem:[#allocation7 + $0x4] sm:$0x1]
    %v105 = vld [vmem:[#allocation7 + $0x5] sm:$0x1]
    %v106 = vld [vmem:[#allocation7 + $0x6] sm:$0x1]
    %v107 = vld [vmem:[#allocation7 + $0x7] sm:$0x1]
    %v108 = vld [vmem:[#allocation8] sm:$0xff]
    %v109 = vld [vmem:[#allocation8 + $0x8] sm:$0xff]
    %v110 = vld [vmem:[#allocation8 + $0x10] sm:$0xff]
    %v111 = vld [vmem:[#allocation8 + $0x18] sm:$0xff]
    %v112 = vld [vmem:[#allocation8 + $0x20] sm:$0xff]
    %v113 = vld [vmem:[#allocation8 + $0x28] sm:$0xff]
    %v114 = vld [vmem:[#allocation8 + $0x30] sm:$0xff]
    %v115 = vld [vmem:[#allocation8 + $0x38] sm:$0xff]
    %v116 = vld [vmem:[#allocation8 + $0x40] sm:$0xff]
    %v117 = vld [vmem:[#allocation8 + $0x48] sm:$0xff]
    %v118 = vld [vmem:[#allocation8 + $0x50] sm:$0xff]
    %v119 = vld [vmem:[#allocation8 + $0x58] sm:$0xff]
    %v120 = vld [vmem:[#allocation8 + $0x60] sm:$0xff]
    %v121 = vld [vmem:[#allocation8 + $0x68] sm:$0xff]
    %v122 = vld [vmem:[#allocation8 + $0x70] sm:$0xf]
    %v123 = vld [vmem:[#allocation8 + $0x78] sm:$0xf]
    %vm124 = vcmask 261120
    %v125 = vsel %vm124, %v82, 0.0
    %126 = vadd.xlane.f32.xlu0 %v125
    %v127 = vpop.xlane.xlu0 %126
    %v128 = vsel %vm124, %v83, 0.0
    %129 = vadd.xlane.f32.xlu0 %v128
    %v130 = vpop.xlane.xlu0 %129
    %v131 = vrcp.pop 32.0
    %v132 = vmul.f32 32.0, %v131
    %v133 = vsub.f32 1.0, %v132
    %v134 = vmul.f32 %v131, %v133
    %v135 = vadd.f32 %v131, %v134
    %vm136 = vweird.f32 %v131
    %v137 = vsel %vm136, %v131, %v135
    %v138 = vmul.f32 %v127, %v137
    %v139 = vmul.f32 %v130, %v137
    %v140 = vsub.f32 %v82, %v138
    %v141 = vsub.f32 %v83, %v139
    %v142 = vmul.f32 %v140, %v140
    %v143 = vmul.f32 %v141, %v141
    %v144 = vsel %vm124, %v142, 0.0
    %145 = vadd.xlane.f32.xlu0 %v144
    %v146 = vpop.xlane.xlu0 %145
    %v147 = vsel %vm124, %v143, 0.0
    %148 = vadd.xlane.f32.xlu0 %v147
    %v149 = vpop.xlane.xlu0 %148
    %v150 = vmul.f32 %v146, %v137
    %v151 = vmul.f32 %v149, %v137
    %v152 = vadd.f32 %v150, 1e-05
    %v153 = vadd.f32 %v151, 1e-05
    %v154 = vrsqrt.pop %v152
    %v155 = vmul.f32 %v154, %v152
    %v156 = vmul.f32 %v155, %v154
    %v157 = vmul.f32 0.5, %v156
    %v158 = vsub.f32 1.5, %v157
    %v159 = vmul.f32 %v154, %v158
    %vm160 = vweird.f32 %v152
    %vm161 = vweird.f32 %v154
    %vm162 = vmor %vm160, %vm161
    %v163 = vsel %vm162, %v154, %v159
    %v164 = vrsqrt.pop %v153
    %v165 = vmul.f32 %v164, %v153
    %v166 = vmul.f32 %v165, %v164
    %v167 = vmul.f32 0.5, %v166
    %v168 = vsub.f32 1.5, %v167
    %v169 = vmul.f32 %v164, %v168
    %vm170 = vweird.f32 %v153
    %vm171 = vweird.f32 %v164
    %vm172 = vmor %vm170, %vm171
    %v173 = vsel %vm172, %v164, %v169
    %v174 = vmul.f32 %v140, %v163
    %v175 = vmul.f32 %v141, %v173
    %v176 = vperm.slane %v100, 0
    %v177 = vmul.f32 %v174, %v176
    %v178 = vmul.f32 %v175, %v176
    %v179 = vperm.slane %v101, 0
    %v180 = vadd.f32 %v177, %v179
    %v181 = vadd.f32 %v178, %v179
    %v182 = vperm.slane %v104, 0
    %v184 = vsel %vm124, %v180, 0
    %v187 = vsel %vm124, %v181, 0
    %189 = vmatpush.msra.mxu0 0.0
    %190 = vmatpush.msra.mxu0 0.0
    %191 = vmatpush.msra.mxu0 0.0
    %192 = vmatpush.msra.mxu0 0.0
    %193 = vmatpush.msra.mxu0 0.0
    %194 = vmatpush.msra.mxu0 0.0
    %195 = vmatpush.msra.mxu0 0.0
    %196 = vmatpush.msra.mxu0 0.0
    %197 = vmatpush.msra.mxu0 0.0
    %198 = vmatpush.msra.mxu0 0.0
    %199 = vmatpush.msra.mxu0 0.0
    %200 = vmatpush.msra.mxu0 0.0
    %201 = vmatpush.msra.mxu0 %v111
    %202 = vmatpush.msra.mxu0 %v110
    %203 = vmatpush.msra.mxu0 %v109
    %204 = vmatpush.msra.mxu0 %v108
    %205 = vmatmul.f32.gmra.mxu0 %v184
    %v206 = vpop.f32.mrf.mxu0
    %v207 = vadd.f32 %v182, %v206
    %208 = vmatmul.f32.gmra.mxu0 %v187
    %v209 = vpop.f32.mrf.mxu0
    %v210 = vadd.f32 %v182, %v209
    %211 = vdwg.mxu0
    %vm212 = vcmask 130048
    %v213 = vsel %vm212, %v84, 0.0
    %214 = vadd.xlane.f32.xlu0 %v213
    %v215 = vpop.xlane.xlu0 %214
    %v216 = vsel %vm212, %v85, 0.0
    %217 = vadd.xlane.f32.xlu0 %v216
    %v218 = vpop.xlane.xlu0 %217
    %v219 = vsel %vm212, %v86, 0.0
    %220 = vadd.xlane.f32.xlu0 %v219
    %v221 = vpop.xlane.xlu0 %220
    %v222 = vsel %vm212, %v87, 0.0
    %223 = vadd.xlane.f32.xlu0 %v222
    %v224 = vpop.xlane.xlu0 %223
    %v225 = vsel %vm212, %v88, 0.0
    %226 = vadd.xlane.f32.xlu0 %v225
    %v227 = vpop.xlane.xlu0 %226
    %v228 = vsel %vm212, %v89, 0.0
    %229 = vadd.xlane.f32.xlu0 %v228
    %v230 = vpop.xlane.xlu0 %229
    %v231 = vsel %vm212, %v90, 0.0
    %232 = vadd.xlane.f32.xlu0 %v231
    %v233 = vpop.xlane.xlu0 %232
    %v234 = vsel %vm212, %v91, 0.0
    %235 = vadd.xlane.f32.xlu0 %v234
    %v236 = vpop.xlane.xlu0 %235
    %v237 = vsel %vm212, %v92, 0.0
    %238 = vadd.xlane.f32.xlu0 %v237
    %v239 = vpop.xlane.xlu0 %238
    %v240 = vsel %vm212, %v93, 0.0
    %241 = vadd.xlane.f32.xlu0 %v240
    %v242 = vpop.xlane.xlu0 %241
    %v243 = vsel %vm212, %v94, 0.0
    %244 = vadd.xlane.f32.xlu0 %v243
    %v245 = vpop.xlane.xlu0 %244
    %v246 = vsel %vm212, %v95, 0.0
    %247 = vadd.xlane.f32.xlu0 %v246
    %v248 = vpop.xlane.xlu0 %247
    %v249 = vsel %vm212, %v96, 0.0
    %250 = vadd.xlane.f32.xlu0 %v249
    %v251 = vpop.xlane.xlu0 %250
    %v252 = vsel %vm212, %v97, 0.0
    %253 = vadd.xlane.f32.xlu0 %v252
    %v254 = vpop.xlane.xlu0 %253
    %v255 = vsel %vm212, %v98, 0.0
    %256 = vadd.xlane.f32.xlu0 %v255
    %v257 = vpop.xlane.xlu0 %256
    %v258 = vsel %vm212, %v99, 0.0
    %259 = vadd.xlane.f32.xlu0 %v258
    %v260 = vpop.xlane.xlu0 %259
    %v261 = vrcp.pop 16.0
    %v262 = vmul.f32 16.0, %v261
    %v263 = vsub.f32 1.0, %v262
    %v264 = vmul.f32 %v261, %v263
    %v265 = vadd.f32 %v261, %v264
    %vm266 = vweird.f32 %v261
    %v267 = vsel %vm266, %v261, %v265
    %v268 = vmul.f32 %v215, %v267
    %v269 = vmul.f32 %v218, %v267
    %v270 = vmul.f32 %v221, %v267
    %v271 = vmul.f32 %v224, %v267
    %v272 = vmul.f32 %v227, %v267
    %v273 = vmul.f32 %v230, %v267
    %v274 = vmul.f32 %v233, %v267
    %v275 = vmul.f32 %v236, %v267
    %v276 = vmul.f32 %v239, %v267
    %v277 = vmul.f32 %v242, %v267
    %v278 = vmul.f32 %v245, %v267
    %v279 = vmul.f32 %v248, %v267
    %v280 = vmul.f32 %v251, %v267
    %v281 = vmul.f32 %v254, %v267
    %v282 = vmul.f32 %v257, %v267
    %v283 = vmul.f32 %v260, %v267
    %v284 = vsub.f32 %v84, %v268
    %v285 = vsub.f32 %v85, %v269
    %v286 = vsub.f32 %v86, %v270
    %v287 = vsub.f32 %v87, %v271
    %v288 = vsub.f32 %v88, %v272
    %v289 = vsub.f32 %v89, %v273
    %v290 = vsub.f32 %v90, %v274
    %v291 = vsub.f32 %v91, %v275
    %v292 = vsub.f32 %v92, %v276
    %v293 = vsub.f32 %v93, %v277
    %v294 = vsub.f32 %v94, %v278
    %v295 = vsub.f32 %v95, %v279
    %v296 = vsub.f32 %v96, %v280
    %v297 = vsub.f32 %v97, %v281
    %v298 = vsub.f32 %v98, %v282
    %v299 = vsub.f32 %v99, %v283
    %v300 = vmul.f32 %v284, %v284
    %v301 = vmul.f32 %v285, %v285
    %v302 = vmul.f32 %v286, %v286
    %v303 = vmul.f32 %v287, %v287
    %v304 = vmul.f32 %v288, %v288
    %v305 = vmul.f32 %v289, %v289
    %v306 = vmul.f32 %v290, %v290
    %v307 = vmul.f32 %v291, %v291
    %v308 = vmul.f32 %v292, %v292
    %v309 = vmul.f32 %v293, %v293
    %v310 = vmul.f32 %v294, %v294
    %v311 = vmul.f32 %v295, %v295
    %v312 = vmul.f32 %v296, %v296
    %v313 = vmul.f32 %v297, %v297
    %v314 = vmul.f32 %v298, %v298
    %v315 = vmul.f32 %v299, %v299
    %v316 = vsel %vm212, %v300, 0.0
    %317 = vadd.xlane.f32.xlu0 %v316
    %v318 = vpop.xlane.xlu0 %317
    %v319 = vsel %vm212, %v301, 0.0
    %320 = vadd.xlane.f32.xlu0 %v319
    %v321 = vpop.xlane.xlu0 %320
    %v322 = vsel %vm212, %v302, 0.0
    %323 = vadd.xlane.f32.xlu0 %v322
    %v324 = vpop.xlane.xlu0 %323
    %v325 = vsel %vm212, %v303, 0.0
    %326 = vadd.xlane.f32.xlu0 %v325
    %v327 = vpop.xlane.xlu0 %326
    %v328 = vsel %vm212, %v304, 0.0
    %329 = vadd.xlane.f32.xlu0 %v328
    %v330 = vpop.xlane.xlu0 %329
    %v331 = vsel %vm212, %v305, 0.0
    %332 = vadd.xlane.f32.xlu0 %v331
    %v333 = vpop.xlane.xlu0 %332
    %v334 = vsel %vm212, %v306, 0.0
    %335 = vadd.xlane.f32.xlu0 %v334
    %v336 = vpop.xlane.xlu0 %335
    %v337 = vsel %vm212, %v307, 0.0
    %338 = vadd.xlane.f32.xlu0 %v337
    %v339 = vpop.xlane.xlu0 %338
    %v340 = vsel %vm212, %v308, 0.0
    %341 = vadd.xlane.f32.xlu0 %v340
    %v342 = vpop.xlane.xlu0 %341
    %v343 = vsel %vm212, %v309, 0.0
    %344 = vadd.xlane.f32.xlu0 %v343
    %v345 = vpop.xlane.xlu0 %344
    %v346 = vsel %vm212, %v310, 0.0
    %347 = vadd.xlane.f32.xlu0 %v346
    %v348 = vpop.xlane.xlu0 %347
    %v349 = vsel %vm212, %v311, 0.0
    %350 = vadd.xlane.f32.xlu0 %v349
    %v351 = vpop.xlane.xlu0 %350
    %v352 = vsel %vm212, %v312, 0.0
    %353 = vadd.xlane.f32.xlu0 %v352
    %v354 = vpop.xlane.xlu0 %353
    %v355 = vsel %vm212, %v313, 0.0
    %356 = vadd.xlane.f32.xlu0 %v355
    %v357 = vpop.xlane.xlu0 %356
    %v358 = vsel %vm212, %v314, 0.0
    %359 = vadd.xlane.f32.xlu0 %v358
    %v360 = vpop.xlane.xlu0 %359
    %v361 = vsel %vm212, %v315, 0.0
    %362 = vadd.xlane.f32.xlu0 %v361
    %v363 = vpop.xlane.xlu0 %362
    %v364 = vmul.f32 %v318, %v267
    %v365 = vmul.f32 %v321, %v267
    %v366 = vmul.f32 %v324, %v267
    %v367 = vmul.f32 %v327, %v267
    %v368 = vmul.f32 %v330, %v267
    %v369 = vmul.f32 %v333, %v267
    %v370 = vmul.f32 %v336, %v267
    %v371 = vmul.f32 %v339, %v267
    %v372 = vmul.f32 %v342, %v267
    %v373 = vmul.f32 %v345, %v267
    %v374 = vmul.f32 %v348, %v267
    %v375 = vmul.f32 %v351, %v267
    %v376 = vmul.f32 %v354, %v267
    %v377 = vmul.f32 %v357, %v267
    %v378 = vmul.f32 %v360, %v267
    %v379 = vmul.f32 %v363, %v267
    %v380 = vadd.f32 %v364, 1e-05
    %v381 = vadd.f32 %v365, 1e-05
    %v382 = vadd.f32 %v366, 1e-05
    %v383 = vadd.f32 %v367, 1e-05
    %v384 = vadd.f32 %v368, 1e-05
    %v385 = vadd.f32 %v369, 1e-05
    %v386 = vadd.f32 %v370, 1e-05
    %v387 = vadd.f32 %v371, 1e-05
    %v388 = vadd.f32 %v372, 1e-05
    %v389 = vadd.f32 %v373, 1e-05
    %v390 = vadd.f32 %v374, 1e-05
    %v391 = vadd.f32 %v375, 1e-05
    %v392 = vadd.f32 %v376, 1e-05
    %v393 = vadd.f32 %v377, 1e-05
    %v394 = vadd.f32 %v378, 1e-05
    %v395 = vadd.f32 %v379, 1e-05
    %v396 = vrsqrt.pop %v380
    %v397 = vmul.f32 %v396, %v380
    %v398 = vmul.f32 %v397, %v396
    %v399 = vmul.f32 0.5, %v398
    %v400 = vsub.f32 1.5, %v399
    %v401 = vmul.f32 %v396, %v400
    %vm402 = vweird.f32 %v380
    %vm403 = vweird.f32 %v396
    %vm404 = vmor %vm402, %vm403
    %v405 = vsel %vm404, %v396, %v401
    %v406 = vrsqrt.pop %v381
    %v407 = vmul.f32 %v406, %v381
    %v408 = vmul.f32 %v407, %v406
    %v409 = vmul.f32 0.5, %v408
    %v410 = vsub.f32 1.5, %v409
    %v411 = vmul.f32 %v406, %v410
    %vm412 = vweird.f32 %v381
    %vm413 = vweird.f32 %v406
    %vm414 = vmor %vm412, %vm413
    %v415 = vsel %vm414, %v406, %v411
    %v416 = vrsqrt.pop %v382
    %v417 = vmul.f32 %v416, %v382
    %v418 = vmul.f32 %v417, %v416
    %v419 = vmul.f32 0.5, %v418
    %v420 = vsub.f32 1.5, %v419
    %v421 = vmul.f32 %v416, %v420
    %vm422 = vweird.f32 %v382
    %vm423 = vweird.f32 %v416
    %vm424 = vmor %vm422, %vm423
    %v425 = vsel %vm424, %v416, %v421
    %v426 = vrsqrt.pop %v383
    %v427 = vmul.f32 %v426, %v383
    %v428 = vmul.f32 %v427, %v426
    %v429 = vmul.f32 0.5, %v428
    %v430 = vsub.f32 1.5, %v429
    %v431 = vmul.f32 %v426, %v430
    %vm432 = vweird.f32 %v383
    %vm433 = vweird.f32 %v426
    %vm434 = vmor %vm432, %vm433
    %v435 = vsel %vm434, %v426, %v431
    %v436 = vrsqrt.pop %v384
    %v437 = vmul.f32 %v436, %v384
    %v438 = vmul.f32 %v437, %v436
    %v439 = vmul.f32 0.5, %v438
    %v440 = vsub.f32 1.5, %v439
    %v441 = vmul.f32 %v436, %v440
    %vm442 = vweird.f32 %v384
    %vm443 = vweird.f32 %v436
    %vm444 = vmor %vm442, %vm443
    %v445 = vsel %vm444, %v436, %v441
    %v446 = vrsqrt.pop %v385
    %v447 = vmul.f32 %v446, %v385
    %v448 = vmul.f32 %v447, %v446
    %v449 = vmul.f32 0.5, %v448
    %v450 = vsub.f32 1.5, %v449
    %v451 = vmul.f32 %v446, %v450
    %vm452 = vweird.f32 %v385
    %vm453 = vweird.f32 %v446
    %vm454 = vmor %vm452, %vm453
    %v455 = vsel %vm454, %v446, %v451
    %v456 = vrsqrt.pop %v386
    %v457 = vmul.f32 %v456, %v386
    %v458 = vmul.f32 %v457, %v456
    %v459 = vmul.f32 0.5, %v458
    %v460 = vsub.f32 1.5, %v459
    %v461 = vmul.f32 %v456, %v460
    %vm462 = vweird.f32 %v386
    %vm463 = vweird.f32 %v456
    %vm464 = vmor %vm462, %vm463
    %v465 = vsel %vm464, %v456, %v461
    %v466 = vrsqrt.pop %v387
    %v467 = vmul.f32 %v466, %v387
    %v468 = vmul.f32 %v467, %v466
    %v469 = vmul.f32 0.5, %v468
    %v470 = vsub.f32 1.5, %v469
    %v471 = vmul.f32 %v466, %v470
    %vm472 = vweird.f32 %v387
    %vm473 = vweird.f32 %v466
    %vm474 = vmor %vm472, %vm473
    %v475 = vsel %vm474, %v466, %v471
    %v476 = vrsqrt.pop %v388
    %v477 = vmul.f32 %v476, %v388
    %v478 = vmul.f32 %v477, %v476
    %v479 = vmul.f32 0.5, %v478
    %v480 = vsub.f32 1.5, %v479
    %v481 = vmul.f32 %v476, %v480
    %vm482 = vweird.f32 %v388
    %vm483 = vweird.f32 %v476
    %vm484 = vmor %vm482, %vm483
    %v485 = vsel %vm484, %v476, %v481
    %v486 = vrsqrt.pop %v389
    %v487 = vmul.f32 %v486, %v389
    %v488 = vmul.f32 %v487, %v486
    %v489 = vmul.f32 0.5, %v488
    %v490 = vsub.f32 1.5, %v489
    %v491 = vmul.f32 %v486, %v490
    %vm492 = vweird.f32 %v389
    %vm493 = vweird.f32 %v486
    %vm494 = vmor %vm492, %vm493
    %v495 = vsel %vm494, %v486, %v491
    %v496 = vrsqrt.pop %v390
    %v497 = vmul.f32 %v496, %v390
    %v498 = vmul.f32 %v497, %v496
    %v499 = vmul.f32 0.5, %v498
    %v500 = vsub.f32 1.5, %v499
    %v501 = vmul.f32 %v496, %v500
    %vm502 = vweird.f32 %v390
    %vm503 = vweird.f32 %v496
    %vm504 = vmor %vm502, %vm503
    %v505 = vsel %vm504, %v496, %v501
    %v506 = vrsqrt.pop %v391
    %v507 = vmul.f32 %v506, %v391
    %v508 = vmul.f32 %v507, %v506
    %v509 = vmul.f32 0.5, %v508
    %v510 = vsub.f32 1.5, %v509
    %v511 = vmul.f32 %v506, %v510
    %vm512 = vweird.f32 %v391
    %vm513 = vweird.f32 %v506
    %vm514 = vmor %vm512, %vm513
    %v515 = vsel %vm514, %v506, %v511
    %v516 = vrsqrt.pop %v392
    %v517 = vmul.f32 %v516, %v392
    %v518 = vmul.f32 %v517, %v516
    %v519 = vmul.f32 0.5, %v518
    %v520 = vsub.f32 1.5, %v519
    %v521 = vmul.f32 %v516, %v520
    %vm522 = vweird.f32 %v392
    %vm523 = vweird.f32 %v516
    %vm524 = vmor %vm522, %vm523
    %v525 = vsel %vm524, %v516, %v521
    %v526 = vrsqrt.pop %v393
    %v527 = vmul.f32 %v526, %v393
    %v528 = vmul.f32 %v527, %v526
    %v529 = vmul.f32 0.5, %v528
    %v530 = vsub.f32 1.5, %v529
    %v531 = vmul.f32 %v526, %v530
    %vm532 = vweird.f32 %v393
    %vm533 = vweird.f32 %v526
    %vm534 = vmor %vm532, %vm533
    %v535 = vsel %vm534, %v526, %v531
    %v536 = vrsqrt.pop %v394
    %v537 = vmul.f32 %v536, %v394
    %v538 = vmul.f32 %v537, %v536
    %v539 = vmul.f32 0.5, %v538
    %v540 = vsub.f32 1.5, %v539
    %v541 = vmul.f32 %v536, %v540
    %vm542 = vweird.f32 %v394
    %vm543 = vweird.f32 %v536
    %vm544 = vmor %vm542, %vm543
    %v545 = vsel %vm544, %v536, %v541
    %v546 = vrsqrt.pop %v395
    %v547 = vmul.f32 %v546, %v395
    %v548 = vmul.f32 %v547, %v546
    %v549 = vmul.f32 0.5, %v548
    %v550 = vsub.f32 1.5, %v549
    %v551 = vmul.f32 %v546, %v550
    %vm552 = vweird.f32 %v395
    %vm553 = vweird.f32 %v546
    %vm554 = vmor %vm552, %vm553
    %v555 = vsel %vm554, %v546, %v551
    %v556 = vmul.f32 %v284, %v405
    %v557 = vmul.f32 %v285, %v415
    %v558 = vmul.f32 %v286, %v425
    %v559 = vmul.f32 %v287, %v435
    %v560 = vmul.f32 %v288, %v445
    %v561 = vmul.f32 %v289, %v455
    %v562 = vmul.f32 %v290, %v465
    %v563 = vmul.f32 %v291, %v475
    %v564 = vmul.f32 %v292, %v485
    %v565 = vmul.f32 %v293, %v495
    %v566 = vmul.f32 %v294, %v505
    %v567 = vmul.f32 %v295, %v515
    %v568 = vmul.f32 %v296, %v525
    %v569 = vmul.f32 %v297, %v535
    %v570 = vmul.f32 %v298, %v545
    %v571 = vmul.f32 %v299, %v555
    %v572 = vperm.slane %v102, 0
    %v573 = vmul.f32 %v556, %v572
    %v574 = vmul.f32 %v557, %v572
    %v575 = vmul.f32 %v558, %v572
    %v576 = vmul.f32 %v559, %v572
    %v577 = vmul.f32 %v560, %v572
    %v578 = vmul.f32 %v561, %v572
    %v579 = vmul.f32 %v562, %v572
    %v580 = vmul.f32 %v563, %v572
    %v581 = vmul.f32 %v564, %v572
    %v582 = vmul.f32 %v565, %v572
    %v583 = vmul.f32 %v566, %v572
    %v584 = vmul.f32 %v567, %v572
    %v585 = vmul.f32 %v568, %v572
    %v586 = vmul.f32 %v569, %v572
    %v587 = vmul.f32 %v570, %v572
    %v588 = vmul.f32 %v571, %v572
    %v589 = vperm.slane %v103, 0
    %v590 = vadd.f32 %v573, %v589
    %v591 = vadd.f32 %v574, %v589
    %v592 = vadd.f32 %v575, %v589
    %v593 = vadd.f32 %v576, %v589
    %v594 = vadd.f32 %v577, %v589
    %v595 = vadd.f32 %v578, %v589
    %v596 = vadd.f32 %v579, %v589
    %v597 = vadd.f32 %v580, %v589
    %v598 = vadd.f32 %v581, %v589
    %v599 = vadd.f32 %v582, %v589
    %v600 = vadd.f32 %v583, %v589
    %v601 = vadd.f32 %v584, %v589
    %v602 = vadd.f32 %v585, %v589
    %v603 = vadd.f32 %v586, %v589
    %v604 = vadd.f32 %v587, %v589
    %v605 = vadd.f32 %v588, %v589
    %v606 = vperm.slane %v107, 0
    %v608 = vsel %vm212, %v590, 0
    %v611 = vsel %vm212, %v591, 0
    %v614 = vsel %vm212, %v592, 0
    %v617 = vsel %vm212, %v593, 0
    %v620 = vsel %vm212, %v594, 0
    %v623 = vsel %vm212, %v595, 0
    %v626 = vsel %vm212, %v596, 0
    %v629 = vsel %vm212, %v597, 0
    %v632 = vsel %vm212, %v598, 0
    %v635 = vsel %vm212, %v599, 0
    %v638 = vsel %vm212, %v600, 0
    %v641 = vsel %vm212, %v601, 0
    %v644 = vsel %vm212, %v602, 0
    %v647 = vsel %vm212, %v603, 0
    %v650 = vsel %vm212, %v604, 0
    %v653 = vsel %vm212, %v605, 0
    %655 = vmatpush.msra.mxu0 0.0
    %656 = vmatpush.msra.mxu0 0.0
    %657 = vmatpush.msra.mxu0 0.0
    %658 = vmatpush.msra.mxu0 0.0
    %659 = vmatpush.msra.mxu0 0.0
    %660 = vmatpush.msra.mxu0 0.0
    %661 = vmatpush.msra.mxu0 0.0
    %662 = vmatpush.msra.mxu0 0.0
    %663 = vmatpush.msra.mxu0 0.0
    %664 = vmatpush.msra.mxu0 0.0
    %665 = vmatpush.msra.mxu0 0.0
    %666 = vmatpush.msra.mxu0 0.0
    %667 = vmatpush.msra.mxu0 0.0
    %668 = vmatpush.msra.mxu0 0.0
    %669 = vmatpush.msra.mxu0 %v121
    %670 = vmatpush.msra.mxu0 %v120
    %671 = vmatmul.f32.gmra.mxu0 %v608
    %v672 = vpop.f32.mrf.mxu0
    %v673 = vadd.f32 %v606, %v672
    %674 = vmatmul.f32.gmra.mxu0 %v611
    %v675 = vpop.f32.mrf.mxu0
    %v676 = vadd.f32 %v606, %v675
    %677 = vmatmul.f32.gmra.mxu0 %v614
    %v678 = vpop.f32.mrf.mxu0
    %v679 = vadd.f32 %v606, %v678
    %680 = vmatmul.f32.gmra.mxu0 %v617
    %v681 = vpop.f32.mrf.mxu0
    %v682 = vadd.f32 %v606, %v681
    %683 = vmatmul.f32.gmra.mxu0 %v620
    %v684 = vpop.f32.mrf.mxu0
    %v685 = vadd.f32 %v606, %v684
    %686 = vmatmul.f32.gmra.mxu0 %v623
    %v687 = vpop.f32.mrf.mxu0
    %v688 = vadd.f32 %v606, %v687
    %689 = vmatmul.f32.gmra.mxu0 %v626
    %v690 = vpop.f32.mrf.mxu0
    %v691 = vadd.f32 %v606, %v690
    %692 = vmatmul.f32.gmra.mxu0 %v629
    %v693 = vpop.f32.mrf.mxu0
    %v694 = vadd.f32 %v606, %v693
    %695 = vmatmul.f32.gmra.mxu0 %v632
    %v696 = vpop.f32.mrf.mxu0
    %v697 = vadd.f32 %v606, %v696
    %698 = vmatmul.f32.gmra.mxu0 %v635
    %v699 = vpop.f32.mrf.mxu0
    %v700 = vadd.f32 %v606, %v699
    %701 = vmatmul.f32.gmra.mxu0 %v638
    %v702 = vpop.f32.mrf.mxu0
    %v703 = vadd.f32 %v606, %v702
    %704 = vmatmul.f32.gmra.mxu0 %v641
    %v705 = vpop.f32.mrf.mxu0
    %v706 = vadd.f32 %v606, %v705
    %707 = vmatmul.f32.gmra.mxu0 %v644
    %v708 = vpop.f32.mrf.mxu0
    %v709 = vadd.f32 %v606, %v708
    %710 = vmatmul.f32.gmra.mxu0 %v647
    %v711 = vpop.f32.mrf.mxu0
    %v712 = vadd.f32 %v606, %v711
    %713 = vmatmul.f32.gmra.mxu0 %v650
    %v714 = vpop.f32.mrf.mxu0
    %v715 = vadd.f32 %v606, %v714
    %716 = vmatmul.f32.gmra.mxu0 %v653
    %v717 = vpop.f32.mrf.mxu0
    %v718 = vadd.f32 %v606, %v717
    %719 = vdwg.mxu0
    %v721 = vrot.slane %v207, 1
    %v722 = vrot.slane %v207, 2
    %v723 = vrot.slane %v207, 3
    %v724 = vrot.slane %v207, 4
    %v725 = vrot.slane %v207, 5
    %v726 = vrot.slane %v207, 6
    %v727 = vrot.slane %v207, 7
    %v728 = vperm.slane %v207, 0
    %v729 = vperm.slane %v721, 0
    %v730 = vperm.slane %v722, 0
    %v731 = vperm.slane %v723, 0
    %v732 = vperm.slane %v724, 0
    %v733 = vperm.slane %v725, 0
    %v734 = vperm.slane %v726, 0
    %v735 = vperm.slane %v727, 0
    %744 = vrot.lane.b32.xlu0 %v207, 96
    %v745 = vpop.permute.xlu0 %744
    %v747 = vmul.f32 %v728, %v745
    %v748 = vmul.f32 %v729, %v745
    %v749 = vmul.f32 %v730, %v745
    %v750 = vmul.f32 %v731, %v745
    %v751 = vmul.f32 %v732, %v745
    %v752 = vmul.f32 %v733, %v745
    %v753 = vmul.f32 %v734, %v745
    %v754 = vmul.f32 %v735, %v745
    %v756 = vrot.slane %v210, 1
    %v757 = vrot.slane %v210, 2
    %v758 = vrot.slane %v210, 3
    %v759 = vrot.slane %v210, 4
    %v760 = vrot.slane %v210, 5
    %v761 = vrot.slane %v210, 6
    %v762 = vrot.slane %v210, 7
    %v763 = vperm.slane %v210, 0
    %v764 = vperm.slane %v756, 0
    %v765 = vperm.slane %v757, 0
    %v766 = vperm.slane %v758, 0
    %v767 = vperm.slane %v759, 0
    %v768 = vperm.slane %v760, 0
    %v769 = vperm.slane %v761, 0
    %v770 = vperm.slane %v762, 0
    %779 = vrot.lane.b32.xlu0 %v210, 96
    %v780 = vpop.permute.xlu0 %779
    %v782 = vmul.f32 %v763, %v780
    %v783 = vmul.f32 %v764, %v780
    %v784 = vmul.f32 %v765, %v780
    %v785 = vmul.f32 %v766, %v780
    %v786 = vmul.f32 %v767, %v780
    %v787 = vmul.f32 %v768, %v780
    %v788 = vmul.f32 %v769, %v780
    %v789 = vmul.f32 %v770, %v780
    %v791 = vsel %vm124, %v747, 0
    %v794 = vsel %vm124, %v748, 0
    %v797 = vsel %vm124, %v749, 0
    %v800 = vsel %vm124, %v750, 0
    %v803 = vsel %vm124, %v751, 0
    %v806 = vsel %vm124, %v752, 0
    %v809 = vsel %vm124, %v753, 0
    %v812 = vsel %vm124, %v754, 0
    %v815 = vsel %vm124, %v782, 0
    %v818 = vsel %vm124, %v783, 0
    %v821 = vsel %vm124, %v784, 0
    %v824 = vsel %vm124, %v785, 0
    %v827 = vsel %vm124, %v786, 0
    %v830 = vsel %vm124, %v787, 0
    %v833 = vsel %vm124, %v788, 0
    %v836 = vsel %vm124, %v789, 0
    %838 = vmatpush.msra.mxu0 0.0
    %839 = vmatpush.msra.mxu0 0.0
    %840 = vmatpush.msra.mxu0 0.0
    %841 = vmatpush.msra.mxu0 0.0
    %842 = vmatpush.msra.mxu0 0.0
    %843 = vmatpush.msra.mxu0 0.0
    %844 = vmatpush.msra.mxu0 0.0
    %845 = vmatpush.msra.mxu0 0.0
    %846 = vmatpush.msra.mxu0 0.0
    %847 = vmatpush.msra.mxu0 0.0
    %848 = vmatpush.msra.mxu0 0.0
    %849 = vmatpush.msra.mxu0 0.0
    %850 = vmatpush.msra.mxu0 %v119
    %851 = vmatpush.msra.mxu0 %v118
    %852 = vmatpush.msra.mxu0 %v117
    %853 = vmatpush.msra.mxu0 %v116
    %854 = vmatmul.f32.gmra.mxu0 %v791
    %v855 = vpop.f32.mrf.mxu0
    %v856 = vadd.f32 %v673, %v855
    %857 = vmatmul.f32.gmra.mxu0 %v794
    %v858 = vpop.f32.mrf.mxu0
    %v859 = vadd.f32 %v676, %v858
    %860 = vmatmul.f32.gmra.mxu0 %v797
    %v861 = vpop.f32.mrf.mxu0
    %v862 = vadd.f32 %v679, %v861
    %863 = vmatmul.f32.gmra.mxu0 %v800
    %v864 = vpop.f32.mrf.mxu0
    %v865 = vadd.f32 %v682, %v864
    %866 = vmatmul.f32.gmra.mxu0 %v803
    %v867 = vpop.f32.mrf.mxu0
    %v868 = vadd.f32 %v685, %v867
    %869 = vmatmul.f32.gmra.mxu0 %v806
    %v870 = vpop.f32.mrf.mxu0
    %v871 = vadd.f32 %v688, %v870
    %872 = vmatmul.f32.gmra.mxu0 %v809
    %v873 = vpop.f32.mrf.mxu0
    %v874 = vadd.f32 %v691, %v873
    %875 = vmatmul.f32.gmra.mxu0 %v812
    %v876 = vpop.f32.mrf.mxu0
    %v877 = vadd.f32 %v694, %v876
    %878 = vmatmul.f32.gmra.mxu0 %v815
    %v879 = vpop.f32.mrf.mxu0
    %v880 = vadd.f32 %v697, %v879
    %881 = vmatmul.f32.gmra.mxu0 %v818
    %v882 = vpop.f32.mrf.mxu0
    %v883 = vadd.f32 %v700, %v882
    %884 = vmatmul.f32.gmra.mxu0 %v821
    %v885 = vpop.f32.mrf.mxu0
    %v886 = vadd.f32 %v703, %v885
    %887 = vmatmul.f32.gmra.mxu0 %v824
    %v888 = vpop.f32.mrf.mxu0
    %v889 = vadd.f32 %v706, %v888
    %890 = vmatmul.f32.gmra.mxu0 %v827
    %v891 = vpop.f32.mrf.mxu0
    %v892 = vadd.f32 %v709, %v891
    %893 = vmatmul.f32.gmra.mxu0 %v830
    %v894 = vpop.f32.mrf.mxu0
    %v895 = vadd.f32 %v712, %v894
    %896 = vmatmul.f32.gmra.mxu0 %v833
    %v897 = vpop.f32.mrf.mxu0
    %v898 = vadd.f32 %v715, %v897
    %899 = vmatmul.f32.gmra.mxu0 %v836
    %v900 = vpop.f32.mrf.mxu0
    %v901 = vadd.f32 %v718, %v900
    %902 = vdwg.mxu0
    %vm903 = vcmask 31744
    %v904 = vsel %vm903, %v856, -inf
    %v905 = vrot.slane %v904, 4
    %v906 = vmax.f32 %v904, %v905
    %v907 = vrot.slane %v906, 2
    %v908 = vmax.f32 %v906, %v907
    %v909 = vrot.slane %v908, 1
    %v910 = vmax.f32 %v908, %v909
    %v911 = vsel %vm903, %v859, -inf
    %v912 = vrot.slane %v911, 4
    %v913 = vmax.f32 %v911, %v912
    %v914 = vrot.slane %v913, 2
    %v915 = vmax.f32 %v913, %v914
    %v916 = vrot.slane %v915, 1
    %v917 = vmax.f32 %v915, %v916
    %v918 = vsel %vm903, %v862, -inf
    %v919 = vrot.slane %v918, 4
    %v920 = vmax.f32 %v918, %v919
    %v921 = vrot.slane %v920, 2
    %v922 = vmax.f32 %v920, %v921
    %v923 = vrot.slane %v922, 1
    %v924 = vmax.f32 %v922, %v923
    %v925 = vsel %vm903, %v865, -inf
    %v926 = vrot.slane %v925, 4
    %v927 = vmax.f32 %v925, %v926
    %v928 = vrot.slane %v927, 2
    %v929 = vmax.f32 %v927, %v928
    %v930 = vrot.slane %v929, 1
    %v931 = vmax.f32 %v929, %v930
    %v932 = vsel %vm903, %v868, -inf
    %v933 = vrot.slane %v932, 4
    %v934 = vmax.f32 %v932, %v933
    %v935 = vrot.slane %v934, 2
    %v936 = vmax.f32 %v934, %v935
    %v937 = vrot.slane %v936, 1
    %v938 = vmax.f32 %v936, %v937
    %v939 = vsel %vm903, %v871, -inf
    %v940 = vrot.slane %v939, 4
    %v941 = vmax.f32 %v939, %v940
    %v942 = vrot.slane %v941, 2
    %v943 = vmax.f32 %v941, %v942
    %v944 = vrot.slane %v943, 1
    %v945 = vmax.f32 %v943, %v944
    %v946 = vsel %vm903, %v874, -inf
    %v947 = vrot.slane %v946, 4
    %v948 = vmax.f32 %v946, %v947
    %v949 = vrot.slane %v948, 2
    %v950 = vmax.f32 %v948, %v949
    %v951 = vrot.slane %v950, 1
    %v952 = vmax.f32 %v950, %v951
    %v953 = vsel %vm903, %v877, -inf
    %v954 = vrot.slane %v953, 4
    %v955 = vmax.f32 %v953, %v954
    %v956 = vrot.slane %v955, 2
    %v957 = vmax.f32 %v955, %v956
    %v958 = vrot.slane %v957, 1
    %v959 = vmax.f32 %v957, %v958
    %v960 = vsel %vm903, %v880, -inf
    %v961 = vrot.slane %v960, 4
    %v962 = vmax.f32 %v960, %v961
    %v963 = vrot.slane %v962, 2
    %v964 = vmax.f32 %v962, %v963
    %v965 = vrot.slane %v964, 1
    %v966 = vmax.f32 %v964, %v965
    %v967 = vsel %vm903, %v883, -inf
    %v968 = vrot.slane %v967, 4
    %v969 = vmax.f32 %v967, %v968
    %v970 = vrot.slane %v969, 2
    %v971 = vmax.f32 %v969, %v970
    %v972 = vrot.slane %v971, 1
    %v973 = vmax.f32 %v971, %v972
    %v974 = vsel %vm903, %v886, -inf
    %v975 = vrot.slane %v974, 4
    %v976 = vmax.f32 %v974, %v975
    %v977 = vrot.slane %v976, 2
    %v978 = vmax.f32 %v976, %v977
    %v979 = vrot.slane %v978, 1
    %v980 = vmax.f32 %v978, %v979
    %v981 = vsel %vm903, %v889, -inf
    %v982 = vrot.slane %v981, 4
    %v983 = vmax.f32 %v981, %v982
    %v984 = vrot.slane %v983, 2
    %v985 = vmax.f32 %v983, %v984
    %v986 = vrot.slane %v985, 1
    %v987 = vmax.f32 %v985, %v986
    %v988 = vsel %vm903, %v892, -inf
    %v989 = vrot.slane %v988, 4
    %v990 = vmax.f32 %v988, %v989
    %v991 = vrot.slane %v990, 2
    %v992 = vmax.f32 %v990, %v991
    %v993 = vrot.slane %v992, 1
    %v994 = vmax.f32 %v992, %v993
    %v995 = vsel %vm903, %v895, -inf
    %v996 = vrot.slane %v995, 4
    %v997 = vmax.f32 %v995, %v996
    %v998 = vrot.slane %v997, 2
    %v999 = vmax.f32 %v997, %v998
    %v1000 = vrot.slane %v999, 1
    %v1001 = vmax.f32 %v999, %v1000
    %v1002 = vsel %vm903, %v898, -inf
    %v1003 = vrot.slane %v1002, 4
    %v1004 = vmax.f32 %v1002, %v1003
    %v1005 = vrot.slane %v1004, 2
    %v1006 = vmax.f32 %v1004, %v1005
    %v1007 = vrot.slane %v1006, 1
    %v1008 = vmax.f32 %v1006, %v1007
    %v1009 = vsel %vm903, %v901, -inf
    %v1010 = vrot.slane %v1009, 4
    %v1011 = vmax.f32 %v1009, %v1010
    %v1012 = vrot.slane %v1011, 2
    %v1013 = vmax.f32 %v1011, %v1012
    %v1014 = vrot.slane %v1013, 1
    %v1015 = vmax.f32 %v1013, %v1014
    %v1016 = vsub.f32 %v856, %v910
    %v1017 = vsub.f32 %v859, %v917
    %v1018 = vsub.f32 %v862, %v924
    %v1019 = vsub.f32 %v865, %v931
    %v1020 = vsub.f32 %v868, %v938
    %v1021 = vsub.f32 %v871, %v945
    %v1022 = vsub.f32 %v874, %v952
    %v1023 = vsub.f32 %v877, %v959
    %v1024 = vsub.f32 %v880, %v966
    %v1025 = vsub.f32 %v883, %v973
    %v1026 = vsub.f32 %v886, %v980
    %v1027 = vsub.f32 %v889, %v987
    %v1028 = vsub.f32 %v892, %v994
    %v1029 = vsub.f32 %v895, %v1001
    %v1030 = vsub.f32 %v898, %v1008
    %v1031 = vsub.f32 %v901, %v1015
    %v1032 = vmul.f32 %v1016, 1.442695
    %v1033 = vpow.pop %v1032
    %v1034 = vmul.f32 %v1017, 1.442695
    %v1035 = vpow.pop %v1034
    %v1036 = vmul.f32 %v1018, 1.442695
    %v1037 = vpow.pop %v1036
    %v1038 = vmul.f32 %v1019, 1.442695
    %v1039 = vpow.pop %v1038
    %v1040 = vmul.f32 %v1020, 1.442695
    %v1041 = vpow.pop %v1040
    %v1042 = vmul.f32 %v1021, 1.442695
    %v1043 = vpow.pop %v1042
    %v1044 = vmul.f32 %v1022, 1.442695
    %v1045 = vpow.pop %v1044
    %v1046 = vmul.f32 %v1023, 1.442695
    %v1047 = vpow.pop %v1046
    %v1048 = vmul.f32 %v1024, 1.442695
    %v1049 = vpow.pop %v1048
    %v1050 = vmul.f32 %v1025, 1.442695
    %v1051 = vpow.pop %v1050
    %v1052 = vmul.f32 %v1026, 1.442695
    %v1053 = vpow.pop %v1052
    %v1054 = vmul.f32 %v1027, 1.442695
    %v1055 = vpow.pop %v1054
    %v1056 = vmul.f32 %v1028, 1.442695
    %v1057 = vpow.pop %v1056
    %v1058 = vmul.f32 %v1029, 1.442695
    %v1059 = vpow.pop %v1058
    %v1060 = vmul.f32 %v1030, 1.442695
    %v1061 = vpow.pop %v1060
    %v1062 = vmul.f32 %v1031, 1.442695
    %v1063 = vpow.pop %v1062
    %v1064 = vsel %vm903, %v1033, 0.0
    %v1065 = vrot.slane %v1064, 4
    %v1066 = vadd.f32 %v1064, %v1065
    %v1067 = vrot.slane %v1066, 2
    %v1068 = vadd.f32 %v1066, %v1067
    %v1069 = vrot.slane %v1068, 1
    %v1070 = vadd.f32 %v1068, %v1069
    %v1071 = vsel %vm903, %v1035, 0.0
    %v1072 = vrot.slane %v1071, 4
    %v1073 = vadd.f32 %v1071, %v1072
    %v1074 = vrot.slane %v1073, 2
    %v1075 = vadd.f32 %v1073, %v1074
    %v1076 = vrot.slane %v1075, 1
    %v1077 = vadd.f32 %v1075, %v1076
    %v1078 = vsel %vm903, %v1037, 0.0
    %v1079 = vrot.slane %v1078, 4
    %v1080 = vadd.f32 %v1078, %v1079
    %v1081 = vrot.slane %v1080, 2
    %v1082 = vadd.f32 %v1080, %v1081
    %v1083 = vrot.slane %v1082, 1
    %v1084 = vadd.f32 %v1082, %v1083
    %v1085 = vsel %vm903, %v1039, 0.0
    %v1086 = vrot.slane %v1085, 4
    %v1087 = vadd.f32 %v1085, %v1086
    %v1088 = vrot.slane %v1087, 2
    %v1089 = vadd.f32 %v1087, %v1088
    %v1090 = vrot.slane %v1089, 1
    %v1091 = vadd.f32 %v1089, %v1090
    %v1092 = vsel %vm903, %v1041, 0.0
    %v1093 = vrot.slane %v1092, 4
    %v1094 = vadd.f32 %v1092, %v1093
    %v1095 = vrot.slane %v1094, 2
    %v1096 = vadd.f32 %v1094, %v1095
    %v1097 = vrot.slane %v1096, 1
    %v1098 = vadd.f32 %v1096, %v1097
    %v1099 = vsel %vm903, %v1043, 0.0
    %v1100 = vrot.slane %v1099, 4
    %v1101 = vadd.f32 %v1099, %v1100
    %v1102 = vrot.slane %v1101, 2
    %v1103 = vadd.f32 %v1101, %v1102
    %v1104 = vrot.slane %v1103, 1
    %v1105 = vadd.f32 %v1103, %v1104
    %v1106 = vsel %vm903, %v1045, 0.0
    %v1107 = vrot.slane %v1106, 4
    %v1108 = vadd.f32 %v1106, %v1107
    %v1109 = vrot.slane %v1108, 2
    %v1110 = vadd.f32 %v1108, %v1109
    %v1111 = vrot.slane %v1110, 1
    %v1112 = vadd.f32 %v1110, %v1111
    %v1113 = vsel %vm903, %v1047, 0.0
    %v1114 = vrot.slane %v1113, 4
    %v1115 = vadd.f32 %v1113, %v1114
    %v1116 = vrot.slane %v1115, 2
    %v1117 = vadd.f32 %v1115, %v1116
    %v1118 = vrot.slane %v1117, 1
    %v1119 = vadd.f32 %v1117, %v1118
    %v1120 = vsel %vm903, %v1049, 0.0
    %v1121 = vrot.slane %v1120, 4
    %v1122 = vadd.f32 %v1120, %v1121
    %v1123 = vrot.slane %v1122, 2
    %v1124 = vadd.f32 %v1122, %v1123
    %v1125 = vrot.slane %v1124, 1
    %v1126 = vadd.f32 %v1124, %v1125
    %v1127 = vsel %vm903, %v1051, 0.0
    %v1128 = vrot.slane %v1127, 4
    %v1129 = vadd.f32 %v1127, %v1128
    %v1130 = vrot.slane %v1129, 2
    %v1131 = vadd.f32 %v1129, %v1130
    %v1132 = vrot.slane %v1131, 1
    %v1133 = vadd.f32 %v1131, %v1132
    %v1134 = vsel %vm903, %v1053, 0.0
    %v1135 = vrot.slane %v1134, 4
    %v1136 = vadd.f32 %v1134, %v1135
    %v1137 = vrot.slane %v1136, 2
    %v1138 = vadd.f32 %v1136, %v1137
    %v1139 = vrot.slane %v1138, 1
    %v1140 = vadd.f32 %v1138, %v1139
    %v1141 = vsel %vm903, %v1055, 0.0
    %v1142 = vrot.slane %v1141, 4
    %v1143 = vadd.f32 %v1141, %v1142
    %v1144 = vrot.slane %v1143, 2
    %v1145 = vadd.f32 %v1143, %v1144
    %v1146 = vrot.slane %v1145, 1
    %v1147 = vadd.f32 %v1145, %v1146
    %v1148 = vsel %vm903, %v1057, 0.0
    %v1149 = vrot.slane %v1148, 4
    %v1150 = vadd.f32 %v1148, %v1149
    %v1151 = vrot.slane %v1150, 2
    %v1152 = vadd.f32 %v1150, %v1151
    %v1153 = vrot.slane %v1152, 1
    %v1154 = vadd.f32 %v1152, %v1153
    %v1155 = vsel %vm903, %v1059, 0.0
    %v1156 = vrot.slane %v1155, 4
    %v1157 = vadd.f32 %v1155, %v1156
    %v1158 = vrot.slane %v1157, 2
    %v1159 = vadd.f32 %v1157, %v1158
    %v1160 = vrot.slane %v1159, 1
    %v1161 = vadd.f32 %v1159, %v1160
    %v1162 = vsel %vm903, %v1061, 0.0
    %v1163 = vrot.slane %v1162, 4
    %v1164 = vadd.f32 %v1162, %v1163
    %v1165 = vrot.slane %v1164, 2
    %v1166 = vadd.f32 %v1164, %v1165
    %v1167 = vrot.slane %v1166, 1
    %v1168 = vadd.f32 %v1166, %v1167
    %v1169 = vsel %vm903, %v1063, 0.0
    %v1170 = vrot.slane %v1169, 4
    %v1171 = vadd.f32 %v1169, %v1170
    %v1172 = vrot.slane %v1171, 2
    %v1173 = vadd.f32 %v1171, %v1172
    %v1174 = vrot.slane %v1173, 1
    %v1175 = vadd.f32 %v1173, %v1174
    %v1176 = vrcp.pop %v1070
    %v1177 = vmul.f32 %v1070, %v1176
    %v1178 = vsub.f32 1.0, %v1177
    %v1179 = vmul.f32 %v1176, %v1178
    %v1180 = vadd.f32 %v1176, %v1179
    %vm1181 = vweird.f32 %v1070
    %vm1182 = vweird.f32 %v1176
    %vm1183 = vmor %vm1181, %vm1182
    %v1184 = vsel %vm1183, %v1176, %v1180
    %v1185 = vand.u32 2147483647, %v1070
    %vm1186 = vcmp.eq.f32.partialorder %v1185, 8.507059e+37
    %v1187 = vand.u32 %v1070, 2147483648
    %v1188 = vor.u32 1.1754944e-38, %v1187
    %v1189 = vsel %vm1186, %v1188, %v1184
    %v1190 = vmul.f32 %v1033, %v1189
    %v1191 = vrcp.pop %v1077
    %v1192 = vmul.f32 %v1077, %v1191
    %v1193 = vsub.f32 1.0, %v1192
    %v1194 = vmul.f32 %v1191, %v1193
    %v1195 = vadd.f32 %v1191, %v1194
    %vm1196 = vweird.f32 %v1077
    %vm1197 = vweird.f32 %v1191
    %vm1198 = vmor %vm1196, %vm1197
    %v1199 = vsel %vm1198, %v1191, %v1195
    %v1200 = vand.u32 2147483647, %v1077
    %vm1201 = vcmp.eq.f32.partialorder %v1200, 8.507059e+37
    %v1202 = vand.u32 %v1077, 2147483648
    %v1203 = vor.u32 1.1754944e-38, %v1202
    %v1204 = vsel %vm1201, %v1203, %v1199
    %v1205 = vmul.f32 %v1035, %v1204
    %v1206 = vrcp.pop %v1084
    %v1207 = vmul.f32 %v1084, %v1206
    %v1208 = vsub.f32 1.0, %v1207
    %v1209 = vmul.f32 %v1206, %v1208
    %v1210 = vadd.f32 %v1206, %v1209
    %vm1211 = vweird.f32 %v1084
    %vm1212 = vweird.f32 %v1206
    %vm1213 = vmor %vm1211, %vm1212
    %v1214 = vsel %vm1213, %v1206, %v1210
    %v1215 = vand.u32 2147483647, %v1084
    %vm1216 = vcmp.eq.f32.partialorder %v1215, 8.507059e+37
    %v1217 = vand.u32 %v1084, 2147483648
    %v1218 = vor.u32 1.1754944e-38, %v1217
    %v1219 = vsel %vm1216, %v1218, %v1214
    %v1220 = vmul.f32 %v1037, %v1219
    %v1221 = vrcp.pop %v1091
    %v1222 = vmul.f32 %v1091, %v1221
    %v1223 = vsub.f32 1.0, %v1222
    %v1224 = vmul.f32 %v1221, %v1223
    %v1225 = vadd.f32 %v1221, %v1224
    %vm1226 = vweird.f32 %v1091
    %vm1227 = vweird.f32 %v1221
    %vm1228 = vmor %vm1226, %vm1227
    %v1229 = vsel %vm1228, %v1221, %v1225
    %v1230 = vand.u32 2147483647, %v1091
    %vm1231 = vcmp.eq.f32.partialorder %v1230, 8.507059e+37
    %v1232 = vand.u32 %v1091, 2147483648
    %v1233 = vor.u32 1.1754944e-38, %v1232
    %v1234 = vsel %vm1231, %v1233, %v1229
    %v1235 = vmul.f32 %v1039, %v1234
    %v1236 = vrcp.pop %v1098
    %v1237 = vmul.f32 %v1098, %v1236
    %v1238 = vsub.f32 1.0, %v1237
    %v1239 = vmul.f32 %v1236, %v1238
    %v1240 = vadd.f32 %v1236, %v1239
    %vm1241 = vweird.f32 %v1098
    %vm1242 = vweird.f32 %v1236
    %vm1243 = vmor %vm1241, %vm1242
    %v1244 = vsel %vm1243, %v1236, %v1240
    %v1245 = vand.u32 2147483647, %v1098
    %vm1246 = vcmp.eq.f32.partialorder %v1245, 8.507059e+37
    %v1247 = vand.u32 %v1098, 2147483648
    %v1248 = vor.u32 1.1754944e-38, %v1247
    %v1249 = vsel %vm1246, %v1248, %v1244
    %v1250 = vmul.f32 %v1041, %v1249
    %v1251 = vrcp.pop %v1105
    %v1252 = vmul.f32 %v1105, %v1251
    %v1253 = vsub.f32 1.0, %v1252
    %v1254 = vmul.f32 %v1251, %v1253
    %v1255 = vadd.f32 %v1251, %v1254
    %vm1256 = vweird.f32 %v1105
    %vm1257 = vweird.f32 %v1251
    %vm1258 = vmor %vm1256, %vm1257
    %v1259 = vsel %vm1258, %v1251, %v1255
    %v1260 = vand.u32 2147483647, %v1105
    %vm1261 = vcmp.eq.f32.partialorder %v1260, 8.507059e+37
    %v1262 = vand.u32 %v1105, 2147483648
    %v1263 = vor.u32 1.1754944e-38, %v1262
    %v1264 = vsel %vm1261, %v1263, %v1259
    %v1265 = vmul.f32 %v1043, %v1264
    %v1266 = vrcp.pop %v1112
    %v1267 = vmul.f32 %v1112, %v1266
    %v1268 = vsub.f32 1.0, %v1267
    %v1269 = vmul.f32 %v1266, %v1268
    %v1270 = vadd.f32 %v1266, %v1269
    %vm1271 = vweird.f32 %v1112
    %vm1272 = vweird.f32 %v1266
    %vm1273 = vmor %vm1271, %vm1272
    %v1274 = vsel %vm1273, %v1266, %v1270
    %v1275 = vand.u32 2147483647, %v1112
    %vm1276 = vcmp.eq.f32.partialorder %v1275, 8.507059e+37
    %v1277 = vand.u32 %v1112, 2147483648
    %v1278 = vor.u32 1.1754944e-38, %v1277
    %v1279 = vsel %vm1276, %v1278, %v1274
    %v1280 = vmul.f32 %v1045, %v1279
    %v1281 = vrcp.pop %v1119
    %v1282 = vmul.f32 %v1119, %v1281
    %v1283 = vsub.f32 1.0, %v1282
    %v1284 = vmul.f32 %v1281, %v1283
    %v1285 = vadd.f32 %v1281, %v1284
    %vm1286 = vweird.f32 %v1119
    %vm1287 = vweird.f32 %v1281
    %vm1288 = vmor %vm1286, %vm1287
    %v1289 = vsel %vm1288, %v1281, %v1285
    %v1290 = vand.u32 2147483647, %v1119
    %vm1291 = vcmp.eq.f32.partialorder %v1290, 8.507059e+37
    %v1292 = vand.u32 %v1119, 2147483648
    %v1293 = vor.u32 1.1754944e-38, %v1292
    %v1294 = vsel %vm1291, %v1293, %v1289
    %v1295 = vmul.f32 %v1047, %v1294
    %v1296 = vrcp.pop %v1126
    %v1297 = vmul.f32 %v1126, %v1296
    %v1298 = vsub.f32 1.0, %v1297
    %v1299 = vmul.f32 %v1296, %v1298
    %v1300 = vadd.f32 %v1296, %v1299
    %vm1301 = vweird.f32 %v1126
    %vm1302 = vweird.f32 %v1296
    %vm1303 = vmor %vm1301, %vm1302
    %v1304 = vsel %vm1303, %v1296, %v1300
    %v1305 = vand.u32 2147483647, %v1126
    %vm1306 = vcmp.eq.f32.partialorder %v1305, 8.507059e+37
    %v1307 = vand.u32 %v1126, 2147483648
    %v1308 = vor.u32 1.1754944e-38, %v1307
    %v1309 = vsel %vm1306, %v1308, %v1304
    %v1310 = vmul.f32 %v1049, %v1309
    %v1311 = vrcp.pop %v1133
    %v1312 = vmul.f32 %v1133, %v1311
    %v1313 = vsub.f32 1.0, %v1312
    %v1314 = vmul.f32 %v1311, %v1313
    %v1315 = vadd.f32 %v1311, %v1314
    %vm1316 = vweird.f32 %v1133
    %vm1317 = vweird.f32 %v1311
    %vm1318 = vmor %vm1316, %vm1317
    %v1319 = vsel %vm1318, %v1311, %v1315
    %v1320 = vand.u32 2147483647, %v1133
    %vm1321 = vcmp.eq.f32.partialorder %v1320, 8.507059e+37
    %v1322 = vand.u32 %v1133, 2147483648
    %v1323 = vor.u32 1.1754944e-38, %v1322
    %v1324 = vsel %vm1321, %v1323, %v1319
    %v1325 = vmul.f32 %v1051, %v1324
    %v1326 = vrcp.pop %v1140
    %v1327 = vmul.f32 %v1140, %v1326
    %v1328 = vsub.f32 1.0, %v1327
    %v1329 = vmul.f32 %v1326, %v1328
    %v1330 = vadd.f32 %v1326, %v1329
    %vm1331 = vweird.f32 %v1140
    %vm1332 = vweird.f32 %v1326
    %vm1333 = vmor %vm1331, %vm1332
    %v1334 = vsel %vm1333, %v1326, %v1330
    %v1335 = vand.u32 2147483647, %v1140
    %vm1336 = vcmp.eq.f32.partialorder %v1335, 8.507059e+37
    %v1337 = vand.u32 %v1140, 2147483648
    %v1338 = vor.u32 1.1754944e-38, %v1337
    %v1339 = vsel %vm1336, %v1338, %v1334
    %v1340 = vmul.f32 %v1053, %v1339
    %v1341 = vrcp.pop %v1147
    %v1342 = vmul.f32 %v1147, %v1341
    %v1343 = vsub.f32 1.0, %v1342
    %v1344 = vmul.f32 %v1341, %v1343
    %v1345 = vadd.f32 %v1341, %v1344
    %vm1346 = vweird.f32 %v1147
    %vm1347 = vweird.f32 %v1341
    %vm1348 = vmor %vm1346, %vm1347
    %v1349 = vsel %vm1348, %v1341, %v1345
    %v1350 = vand.u32 2147483647, %v1147
    %vm1351 = vcmp.eq.f32.partialorder %v1350, 8.507059e+37
    %v1352 = vand.u32 %v1147, 2147483648
    %v1353 = vor.u32 1.1754944e-38, %v1352
    %v1354 = vsel %vm1351, %v1353, %v1349
    %v1355 = vmul.f32 %v1055, %v1354
    %v1356 = vrcp.pop %v1154
    %v1357 = vmul.f32 %v1154, %v1356
    %v1358 = vsub.f32 1.0, %v1357
    %v1359 = vmul.f32 %v1356, %v1358
    %v1360 = vadd.f32 %v1356, %v1359
    %vm1361 = vweird.f32 %v1154
    %vm1362 = vweird.f32 %v1356
    %vm1363 = vmor %vm1361, %vm1362
    %v1364 = vsel %vm1363, %v1356, %v1360
    %v1365 = vand.u32 2147483647, %v1154
    %vm1366 = vcmp.eq.f32.partialorder %v1365, 8.507059e+37
    %v1367 = vand.u32 %v1154, 2147483648
    %v1368 = vor.u32 1.1754944e-38, %v1367
    %v1369 = vsel %vm1366, %v1368, %v1364
    %v1370 = vmul.f32 %v1057, %v1369
    %v1371 = vrcp.pop %v1161
    %v1372 = vmul.f32 %v1161, %v1371
    %v1373 = vsub.f32 1.0, %v1372
    %v1374 = vmul.f32 %v1371, %v1373
    %v1375 = vadd.f32 %v1371, %v1374
    %vm1376 = vweird.f32 %v1161
    %vm1377 = vweird.f32 %v1371
    %vm1378 = vmor %vm1376, %vm1377
    %v1379 = vsel %vm1378, %v1371, %v1375
    %v1380 = vand.u32 2147483647, %v1161
    %vm1381 = vcmp.eq.f32.partialorder %v1380, 8.507059e+37
    %v1382 = vand.u32 %v1161, 2147483648
    %v1383 = vor.u32 1.1754944e-38, %v1382
    %v1384 = vsel %vm1381, %v1383, %v1379
    %v1385 = vmul.f32 %v1059, %v1384
    %v1386 = vrcp.pop %v1168
    %v1387 = vmul.f32 %v1168, %v1386
    %v1388 = vsub.f32 1.0, %v1387
    %v1389 = vmul.f32 %v1386, %v1388
    %v1390 = vadd.f32 %v1386, %v1389
    %vm1391 = vweird.f32 %v1168
    %vm1392 = vweird.f32 %v1386
    %vm1393 = vmor %vm1391, %vm1392
    %v1394 = vsel %vm1393, %v1386, %v1390
    %v1395 = vand.u32 2147483647, %v1168
    %vm1396 = vcmp.eq.f32.partialorder %v1395, 8.507059e+37
    %v1397 = vand.u32 %v1168, 2147483648
    %v1398 = vor.u32 1.1754944e-38, %v1397
    %v1399 = vsel %vm1396, %v1398, %v1394
    %v1400 = vmul.f32 %v1061, %v1399
    %v1401 = vrcp.pop %v1175
    %v1402 = vmul.f32 %v1175, %v1401
    %v1403 = vsub.f32 1.0, %v1402
    %v1404 = vmul.f32 %v1401, %v1403
    %v1405 = vadd.f32 %v1401, %v1404
    %vm1406 = vweird.f32 %v1175
    %vm1407 = vweird.f32 %v1401
    %vm1408 = vmor %vm1406, %vm1407
    %v1409 = vsel %vm1408, %v1401, %v1405
    %v1410 = vand.u32 2147483647, %v1175
    %vm1411 = vcmp.eq.f32.partialorder %v1410, 8.507059e+37
    %v1412 = vand.u32 %v1175, 2147483648
    %v1413 = vor.u32 1.1754944e-38, %v1412
    %v1414 = vsel %vm1411, %v1413, %v1409
    %v1415 = vmul.f32 %v1063, %v1414
    %v1417 = vsel %vm903, %v1190, 0
    %v1420 = vsel %vm903, %v1205, 0
    %v1423 = vsel %vm903, %v1220, 0
    %v1426 = vsel %vm903, %v1235, 0
    %v1429 = vsel %vm903, %v1250, 0
    %v1432 = vsel %vm903, %v1265, 0
    %v1435 = vsel %vm903, %v1280, 0
    %v1438 = vsel %vm903, %v1295, 0
    %v1441 = vsel %vm903, %v1310, 0
    %v1444 = vsel %vm903, %v1325, 0
    %v1447 = vsel %vm903, %v1340, 0
    %v1450 = vsel %vm903, %v1355, 0
    %v1453 = vsel %vm903, %v1370, 0
    %v1456 = vsel %vm903, %v1385, 0
    %v1459 = vsel %vm903, %v1400, 0
    %v1462 = vsel %vm903, %v1415, 0
    %vm1464 = vcmask 1043456
    %v1466 = vsel %vm1464, %v122, 0
    %1468 = vmatpush.msra.mxu0 0.0
    %1469 = vmatpush.msra.mxu0 0.0
    %1470 = vmatpush.msra.mxu0 0.0
    %1471 = vmatpush.msra.mxu0 0.0
    %1472 = vmatpush.msra.mxu0 0.0
    %1473 = vmatpush.msra.mxu0 0.0
    %1474 = vmatpush.msra.mxu0 0.0
    %1475 = vmatpush.msra.mxu0 0.0
    %1476 = vmatpush.msra.mxu0 0.0
    %1477 = vmatpush.msra.mxu0 0.0
    %1478 = vmatpush.msra.mxu0 0.0
    %1479 = vmatpush.msra.mxu0 0.0
    %1480 = vmatpush.msra.mxu0 0.0
    %1481 = vmatpush.msra.mxu0 0.0
    %1482 = vmatpush.msra.mxu0 0.0
    %1483 = vmatpush.msra.mxu0 %v1466
    %1484 = vmatmul.f32.gmra.mxu0 %v1417
    %v1485 = vpop.f32.mrf.mxu0
    %v1486 = vadd.f32 0.0, %v1485
    %1487 = vmatmul.f32.gmra.mxu0 %v1420
    %v1488 = vpop.f32.mrf.mxu0
    %v1489 = vadd.f32 0.0, %v1488
    %1490 = vmatmul.f32.gmra.mxu0 %v1423
    %v1491 = vpop.f32.mrf.mxu0
    %v1492 = vadd.f32 0.0, %v1491
    %1493 = vmatmul.f32.gmra.mxu0 %v1426
    %v1494 = vpop.f32.mrf.mxu0
    %v1495 = vadd.f32 0.0, %v1494
    %1496 = vmatmul.f32.gmra.mxu0 %v1429
    %v1497 = vpop.f32.mrf.mxu0
    %v1498 = vadd.f32 0.0, %v1497
    %1499 = vmatmul.f32.gmra.mxu0 %v1432
    %v1500 = vpop.f32.mrf.mxu0
    %v1501 = vadd.f32 0.0, %v1500
    %1502 = vmatmul.f32.gmra.mxu0 %v1435
    %v1503 = vpop.f32.mrf.mxu0
    %v1504 = vadd.f32 0.0, %v1503
    %1505 = vmatmul.f32.gmra.mxu0 %v1438
    %v1506 = vpop.f32.mrf.mxu0
    %v1507 = vadd.f32 0.0, %v1506
    %1508 = vmatmul.f32.gmra.mxu0 %v1441
    %v1509 = vpop.f32.mrf.mxu0
    %v1510 = vadd.f32 0.0, %v1509
    %1511 = vmatmul.f32.gmra.mxu0 %v1444
    %v1512 = vpop.f32.mrf.mxu0
    %v1513 = vadd.f32 0.0, %v1512
    %1514 = vmatmul.f32.gmra.mxu0 %v1447
    %v1515 = vpop.f32.mrf.mxu0
    %v1516 = vadd.f32 0.0, %v1515
    %1517 = vmatmul.f32.gmra.mxu0 %v1450
    %v1518 = vpop.f32.mrf.mxu0
    %v1519 = vadd.f32 0.0, %v1518
    %1520 = vmatmul.f32.gmra.mxu0 %v1453
    %v1521 = vpop.f32.mrf.mxu0
    %v1522 = vadd.f32 0.0, %v1521
    %1523 = vmatmul.f32.gmra.mxu0 %v1456
    %v1524 = vpop.f32.mrf.mxu0
    %v1525 = vadd.f32 0.0, %v1524
    %1526 = vmatmul.f32.gmra.mxu0 %v1459
    %v1527 = vpop.f32.mrf.mxu0
    %v1528 = vadd.f32 0.0, %v1527
    %1529 = vmatmul.f32.gmra.mxu0 %v1462
    %v1530 = vpop.f32.mrf.mxu0
    %v1531 = vadd.f32 0.0, %v1530
    %1532 = vdwg.mxu0
    %1533 = vrot.lane.b32.xlu0 %v207, 64
    %v1534 = vpop.permute.xlu0 %1533
    %v1536 = vmul.f32 %v1486, %v1534
    %v1537 = vmul.f32 %v1489, %v1534
    %v1538 = vmul.f32 %v1492, %v1534
    %v1539 = vmul.f32 %v1495, %v1534
    %v1540 = vmul.f32 %v1498, %v1534
    %v1541 = vmul.f32 %v1501, %v1534
    %v1542 = vmul.f32 %v1504, %v1534
    %v1543 = vmul.f32 %v1507, %v1534
    %v1544 = vsel %vm124, %v1536, 0.0
    %v1545 = vrot.slane %v1544, 4
    %v1546 = vadd.f32 %v1544, %v1545
    %v1547 = vrot.slane %v1546, 2
    %v1548 = vadd.f32 %v1546, %v1547
    %v1549 = vrot.slane %v1548, 1
    %v1550 = vadd.f32 %v1548, %v1549
    %v1551 = vsel %vm124, %v1537, 0.0
    %v1552 = vrot.slane %v1551, 4
    %v1553 = vadd.f32 %v1551, %v1552
    %v1554 = vrot.slane %v1553, 2
    %v1555 = vadd.f32 %v1553, %v1554
    %v1556 = vrot.slane %v1555, 1
    %v1557 = vadd.f32 %v1555, %v1556
    %v1558 = vsel %vm124, %v1538, 0.0
    %v1559 = vrot.slane %v1558, 4
    %v1560 = vadd.f32 %v1558, %v1559
    %v1561 = vrot.slane %v1560, 2
    %v1562 = vadd.f32 %v1560, %v1561
    %v1563 = vrot.slane %v1562, 1
    %v1564 = vadd.f32 %v1562, %v1563
    %v1565 = vsel %vm124, %v1539, 0.0
    %v1566 = vrot.slane %v1565, 4
    %v1567 = vadd.f32 %v1565, %v1566
    %v1568 = vrot.slane %v1567, 2
    %v1569 = vadd.f32 %v1567, %v1568
    %v1570 = vrot.slane %v1569, 1
    %v1571 = vadd.f32 %v1569, %v1570
    %v1572 = vsel %vm124, %v1540, 0.0
    %v1573 = vrot.slane %v1572, 4
    %v1574 = vadd.f32 %v1572, %v1573
    %v1575 = vrot.slane %v1574, 2
    %v1576 = vadd.f32 %v1574, %v1575
    %v1577 = vrot.slane %v1576, 1
    %v1578 = vadd.f32 %v1576, %v1577
    %v1579 = vsel %vm124, %v1541, 0.0
    %v1580 = vrot.slane %v1579, 4
    %v1581 = vadd.f32 %v1579, %v1580
    %v1582 = vrot.slane %v1581, 2
    %v1583 = vadd.f32 %v1581, %v1582
    %v1584 = vrot.slane %v1583, 1
    %v1585 = vadd.f32 %v1583, %v1584
    %v1586 = vsel %vm124, %v1542, 0.0
    %v1587 = vrot.slane %v1586, 4
    %v1588 = vadd.f32 %v1586, %v1587
    %v1589 = vrot.slane %v1588, 2
    %v1590 = vadd.f32 %v1588, %v1589
    %v1591 = vrot.slane %v1590, 1
    %v1592 = vadd.f32 %v1590, %v1591
    %v1593 = vsel %vm124, %v1543, 0.0
    %v1594 = vrot.slane %v1593, 4
    %v1595 = vadd.f32 %v1593, %v1594
    %v1596 = vrot.slane %v1595, 2
    %v1597 = vadd.f32 %v1595, %v1596
    %v1598 = vrot.slane %v1597, 1
    %v1599 = vadd.f32 %v1597, %v1598
    %1600 = vrot.lane.b32.xlu0 %v210, 64
    %v1601 = vpop.permute.xlu0 %1600
    %v1603 = vmul.f32 %v1510, %v1601
    %v1604 = vmul.f32 %v1513, %v1601
    %v1605 = vmul.f32 %v1516, %v1601
    %v1606 = vmul.f32 %v1519, %v1601
    %v1607 = vmul.f32 %v1522, %v1601
    %v1608 = vmul.f32 %v1525, %v1601
    %v1609 = vmul.f32 %v1528, %v1601
    %v1610 = vmul.f32 %v1531, %v1601
    %v1611 = vsel %vm124, %v1603, 0.0
    %v1612 = vrot.slane %v1611, 4
    %v1613 = vadd.f32 %v1611, %v1612
    %v1614 = vrot.slane %v1613, 2
    %v1615 = vadd.f32 %v1613, %v1614
    %v1616 = vrot.slane %v1615, 1
    %v1617 = vadd.f32 %v1615, %v1616
    %v1618 = vsel %vm124, %v1604, 0.0
    %v1619 = vrot.slane %v1618, 4
    %v1620 = vadd.f32 %v1618, %v1619
    %v1621 = vrot.slane %v1620, 2
    %v1622 = vadd.f32 %v1620, %v1621
    %v1623 = vrot.slane %v1622, 1
    %v1624 = vadd.f32 %v1622, %v1623
    %v1625 = vsel %vm124, %v1605, 0.0
    %v1626 = vrot.slane %v1625, 4
    %v1627 = vadd.f32 %v1625, %v1626
    %v1628 = vrot.slane %v1627, 2
    %v1629 = vadd.f32 %v1627, %v1628
    %v1630 = vrot.slane %v1629, 1
    %v1631 = vadd.f32 %v1629, %v1630
    %v1632 = vsel %vm124, %v1606, 0.0
    %v1633 = vrot.slane %v1632, 4
    %v1634 = vadd.f32 %v1632, %v1633
    %v1635 = vrot.slane %v1634, 2
    %v1636 = vadd.f32 %v1634, %v1635
    %v1637 = vrot.slane %v1636, 1
    %v1638 = vadd.f32 %v1636, %v1637
    %v1639 = vsel %vm124, %v1607, 0.0
    %v1640 = vrot.slane %v1639, 4
    %v1641 = vadd.f32 %v1639, %v1640
    %v1642 = vrot.slane %v1641, 2
    %v1643 = vadd.f32 %v1641, %v1642
    %v1644 = vrot.slane %v1643, 1
    %v1645 = vadd.f32 %v1643, %v1644
    %v1646 = vsel %vm124, %v1608, 0.0
    %v1647 = vrot.slane %v1646, 4
    %v1648 = vadd.f32 %v1646, %v1647
    %v1649 = vrot.slane %v1648, 2
    %v1650 = vadd.f32 %v1648, %v1649
    %v1651 = vrot.slane %v1650, 1
    %v1652 = vadd.f32 %v1650, %v1651
    %v1653 = vsel %vm124, %v1609, 0.0
    %v1654 = vrot.slane %v1653, 4
    %v1655 = vadd.f32 %v1653, %v1654
    %v1656 = vrot.slane %v1655, 2
    %v1657 = vadd.f32 %v1655, %v1656
    %v1658 = vrot.slane %v1657, 1
    %v1659 = vadd.f32 %v1657, %v1658
    %v1660 = vsel %vm124, %v1610, 0.0
    %v1661 = vrot.slane %v1660, 4
    %v1662 = vadd.f32 %v1660, %v1661
    %v1663 = vrot.slane %v1662, 2
    %v1664 = vadd.f32 %v1662, %v1663
    %v1665 = vrot.slane %v1664, 1
    %v1666 = vadd.f32 %v1664, %v1665
    %vm1675 = vcmask 1041409
    %v1676 = vsel %vm1675, %v1557, %v1550
    %vm1677 = vcmask 1042434
    %v1678 = vsel %vm1677, %v1564, %v1676
    %vm1679 = vcmask 1043459
    %v1680 = vsel %vm1679, %v1571, %v1678
    %vm1681 = vcmask 1044484
    %v1682 = vsel %vm1681, %v1578, %v1680
    %vm1683 = vcmask 1045509
    %v1684 = vsel %vm1683, %v1585, %v1682
    %vm1685 = vcmask 1046534
    %v1686 = vsel %vm1685, %v1592, %v1684
    %vm1687 = vcmask 1047559
    %v1688 = vsel %vm1687, %v1599, %v1686
    %v1697 = vsel %vm1675, %v1624, %v1617
    %v1698 = vsel %vm1677, %v1631, %v1697
    %v1699 = vsel %vm1679, %v1638, %v1698
    %v1700 = vsel %vm1681, %v1645, %v1699
    %v1701 = vsel %vm1683, %v1652, %v1700
    %v1702 = vsel %vm1685, %v1659, %v1701
    %v1703 = vsel %vm1687, %v1666, %v1702
    %v1704 = vperm.slane %v105, 0
    %v1705 = vsel %vm124, %v1688, 0
    %v1707 = vsel %vm124, %v1703, 0
    %1709 = vmatpush.msra.mxu0 0.0
    %1710 = vmatpush.msra.mxu0 0.0
    %1711 = vmatpush.msra.mxu0 0.0
    %1712 = vmatpush.msra.mxu0 0.0
    %1713 = vmatpush.msra.mxu0 0.0
    %1714 = vmatpush.msra.mxu0 0.0
    %1715 = vmatpush.msra.mxu0 0.0
    %1716 = vmatpush.msra.mxu0 0.0
    %1717 = vmatpush.msra.mxu0 0.0
    %1718 = vmatpush.msra.mxu0 0.0
    %1719 = vmatpush.msra.mxu0 0.0
    %1720 = vmatpush.msra.mxu0 0.0
    %1721 = vmatpush.msra.mxu0 %v115
    %1722 = vmatpush.msra.mxu0 %v114
    %1723 = vmatpush.msra.mxu0 %v113
    %1724 = vmatpush.msra.mxu0 %v112
    %1725 = vmatmul.f32.gmra.mxu0 %v1705
    %v1726 = vpop.f32.mrf.mxu0
    %v1727 = vadd.f32 %v1704, %v1726
    %1728 = vmatmul.f32.gmra.mxu0 %v1707
    %v1729 = vpop.f32.mrf.mxu0
    %v1730 = vadd.f32 %v1704, %v1729
    %1731 = vdwg.mxu0
    %v1732 = vadd.f32 %v1727, %v82
    %v1733 = vadd.f32 %v1730, %v83
    %1734 = vst.msk [vmem:[#allocation10] sm:$0xff] %vm124, %v1732
    %1735 = vst.msk [vmem:[#allocation10 + $0x8] sm:$0xff] %vm124, %v1733
    %v1736 = vperm.slane %v106, 0
    %v1738 = vsel %vm903, %v856, 0
    %v1741 = vsel %vm903, %v859, 0
    %v1744 = vsel %vm903, %v862, 0
    %v1747 = vsel %vm903, %v865, 0
    %v1750 = vsel %vm903, %v868, 0
    %v1753 = vsel %vm903, %v871, 0
    %v1756 = vsel %vm903, %v874, 0
    %v1759 = vsel %vm903, %v877, 0
    %v1762 = vsel %vm903, %v880, 0
    %v1765 = vsel %vm903, %v883, 0
    %v1768 = vsel %vm903, %v886, 0
    %v1771 = vsel %vm903, %v889, 0
    %v1774 = vsel %vm903, %v892, 0
    %v1777 = vsel %vm903, %v895, 0
    %v1780 = vsel %vm903, %v898, 0
    %v1783 = vsel %vm903, %v901, 0
    %v1786 = vsel %vm1464, %v123, 0
    %1788 = vmatpush.msra.mxu0 0.0
    %1789 = vmatpush.msra.mxu0 0.0
    %1790 = vmatpush.msra.mxu0 0.0
    %1791 = vmatpush.msra.mxu0 0.0
    %1792 = vmatpush.msra.mxu0 0.0
    %1793 = vmatpush.msra.mxu0 0.0
    %1794 = vmatpush.msra.mxu0 0.0
    %1795 = vmatpush.msra.mxu0 0.0
    %1796 = vmatpush.msra.mxu0 0.0
    %1797 = vmatpush.msra.mxu0 0.0
    %1798 = vmatpush.msra.mxu0 0.0
    %1799 = vmatpush.msra.mxu0 0.0
    %1800 = vmatpush.msra.mxu0 0.0
    %1801 = vmatpush.msra.mxu0 0.0
    %1802 = vmatpush.msra.mxu0 0.0
    %1803 = vmatpush.msra.mxu0 %v1786
    %1804 = vmatmul.f32.gmra.mxu0 %v1738
    %v1805 = vpop.f32.mrf.mxu0
    %v1806 = vadd.f32 %v1736, %v1805
    %1807 = vmatmul.f32.gmra.mxu0 %v1741
    %v1808 = vpop.f32.mrf.mxu0
    %v1809 = vadd.f32 %v1736, %v1808
    %1810 = vmatmul.f32.gmra.mxu0 %v1744
    %v1811 = vpop.f32.mrf.mxu0
    %v1812 = vadd.f32 %v1736, %v1811
    %1813 = vmatmul.f32.gmra.mxu0 %v1747
    %v1814 = vpop.f32.mrf.mxu0
    %v1815 = vadd.f32 %v1736, %v1814
    %1816 = vmatmul.f32.gmra.mxu0 %v1750
    %v1817 = vpop.f32.mrf.mxu0
    %v1818 = vadd.f32 %v1736, %v1817
    %1819 = vmatmul.f32.gmra.mxu0 %v1753
    %v1820 = vpop.f32.mrf.mxu0
    %v1821 = vadd.f32 %v1736, %v1820
    %1822 = vmatmul.f32.gmra.mxu0 %v1756
    %v1823 = vpop.f32.mrf.mxu0
    %v1824 = vadd.f32 %v1736, %v1823
    %1825 = vmatmul.f32.gmra.mxu0 %v1759
    %v1826 = vpop.f32.mrf.mxu0
    %v1827 = vadd.f32 %v1736, %v1826
    %1828 = vmatmul.f32.gmra.mxu0 %v1762
    %v1829 = vpop.f32.mrf.mxu0
    %v1830 = vadd.f32 %v1736, %v1829
    %1831 = vmatmul.f32.gmra.mxu0 %v1765
    %v1832 = vpop.f32.mrf.mxu0
    %v1833 = vadd.f32 %v1736, %v1832
    %1834 = vmatmul.f32.gmra.mxu0 %v1768
    %v1835 = vpop.f32.mrf.mxu0
    %v1836 = vadd.f32 %v1736, %v1835
    %1837 = vmatmul.f32.gmra.mxu0 %v1771
    %v1838 = vpop.f32.mrf.mxu0
    %v1839 = vadd.f32 %v1736, %v1838
    %1840 = vmatmul.f32.gmra.mxu0 %v1774
    %v1841 = vpop.f32.mrf.mxu0
    %v1842 = vadd.f32 %v1736, %v1841
    %1843 = vmatmul.f32.gmra.mxu0 %v1777
    %v1844 = vpop.f32.mrf.mxu0
    %v1845 = vadd.f32 %v1736, %v1844
    %1846 = vmatmul.f32.gmra.mxu0 %v1780
    %v1847 = vpop.f32.mrf.mxu0
    %v1848 = vadd.f32 %v1736, %v1847
    %1849 = vmatmul.f32.gmra.mxu0 %v1783
    %v1850 = vpop.f32.mrf.mxu0
    %v1851 = vadd.f32 %v1736, %v1850
    %1852 = vdwg.mxu0
    %v1853 = vadd.f32 %v1806, %v84
    %v1854 = vadd.f32 %v1809, %v85
    %v1855 = vadd.f32 %v1812, %v86
    %v1856 = vadd.f32 %v1815, %v87
    %v1857 = vadd.f32 %v1818, %v88
    %v1858 = vadd.f32 %v1821, %v89
    %v1859 = vadd.f32 %v1824, %v90
    %v1860 = vadd.f32 %v1827, %v91
    %v1861 = vadd.f32 %v1830, %v92
    %v1862 = vadd.f32 %v1833, %v93
    %v1863 = vadd.f32 %v1836, %v94
    %v1864 = vadd.f32 %v1839, %v95
    %v1865 = vadd.f32 %v1842, %v96
    %v1866 = vadd.f32 %v1845, %v97
    %v1867 = vadd.f32 %v1848, %v98
    %v1868 = vadd.f32 %v1851, %v99
    %1869 = vst.msk [vmem:[#allocation11] sm:$0xff] %vm212, %v1853
    %1870 = vst.msk [vmem:[#allocation11 + $0x8] sm:$0xff] %vm212, %v1854
    %1871 = vst.msk [vmem:[#allocation11 + $0x10] sm:$0xff] %vm212, %v1855
    %1872 = vst.msk [vmem:[#allocation11 + $0x18] sm:$0xff] %vm212, %v1856
    %1873 = vst.msk [vmem:[#allocation11 + $0x20] sm:$0xff] %vm212, %v1857
    %1874 = vst.msk [vmem:[#allocation11 + $0x28] sm:$0xff] %vm212, %v1858
    %1875 = vst.msk [vmem:[#allocation11 + $0x30] sm:$0xff] %vm212, %v1859
    %1876 = vst.msk [vmem:[#allocation11 + $0x38] sm:$0xff] %vm212, %v1860
    %1877 = vst.msk [vmem:[#allocation11 + $0x40] sm:$0xff] %vm212, %v1861
    %1878 = vst.msk [vmem:[#allocation11 + $0x48] sm:$0xff] %vm212, %v1862
    %1879 = vst.msk [vmem:[#allocation11 + $0x50] sm:$0xff] %vm212, %v1863
    %1880 = vst.msk [vmem:[#allocation11 + $0x58] sm:$0xff] %vm212, %v1864
    %1881 = vst.msk [vmem:[#allocation11 + $0x60] sm:$0xff] %vm212, %v1865
    %1882 = vst.msk [vmem:[#allocation11 + $0x68] sm:$0xff] %vm212, %v1866
    %1883 = vst.msk [vmem:[#allocation11 + $0x70] sm:$0xff] %vm212, %v1867
    %1884 = vst.msk [vmem:[#allocation11 + $0x78] sm:$0xff] %vm212, %v1868
    // Predicated region
    $region34: #{graph_attention_layer.1} parent=1 // pred_check
      _
    $region35: #{graph_attention_layer.1} parent=1 // pred_check_branch
      %1886 = sbr.rel (0) target = $region37
    $region36: #{graph_attention_layer.1} parent=1 // pred_region
      %1888 = vsyncadd [#allocation4], 0
      %s1889 = sshll.u32 [#allocation10], 4
      %s1890 = int_to_ptr.vmem [resolvable:$true] %s1889
      %s1891 = sshll.u32 %s4, 4
      %s1892 = int_to_ptr.hbm [resolvable:$true] %s1891
      %1897 = dma.vmem_to_hbm [thread:$0]  %s1890, 256, %s1892, [#allocation4], 128, 128, 8
    $region37: #{graph_attention_layer.1} parent=1 // pred_fallthru
      _
    // Predicated region
    $region38: #{graph_attention_layer.1} parent=1 // pred_check
      _
    $region39: #{graph_attention_layer.1} parent=1 // pred_check_branch
      %1899 = sbr.rel (0) target = $region41
    $region40: #{graph_attention_layer.1} parent=1 // pred_region
      %1901 = vsyncadd [#allocation12], 0
      %s1902 = sshll.u32 [#allocation11], 4
      %s1903 = int_to_ptr.vmem [resolvable:$true] %s1902
      %s1904 = sshll.u32 %s5, 4
      %s1905 = int_to_ptr.hbm [resolvable:$true] %s1904
      %1910 = dma.vmem_to_hbm [thread:$0]  %s1903, 2048, %s1905, [#allocation12], 128, 128, 8
    $region41: #{graph_attention_layer.1} parent=1 // pred_fallthru
      _
    // Predicated region
    $region42: #{graph_attention_layer.1} parent=1 // pred_check
      _
    $region43: #{graph_attention_layer.1} parent=1 // pred_check_branch
      %1912 = sbr.rel (0) target = $region45
    $region44: #{graph_attention_layer.1} parent=1 // pred_region
      %1914 = dma.done [#allocation4], 256
    $region45: #{graph_attention_layer.1} parent=1 // pred_fallthru
      _
    // Predicated region
    $region46: #{graph_attention_layer.1} parent=1 // pred_check
      _
    $region47: #{graph_attention_layer.1} parent=1 // pred_check_branch
      %1916 = sbr.rel (0) target = $region49
    $region48: #{graph_attention_layer.1} parent=1 // pred_region
      %1918 = dma.done [#allocation12], 2048
    $region49: #{graph_attention_layer.1} parent=1 // pred_fallthru
      _
    %1919 = vsyncpa [#allocation3], 1
    %1920 = vsyncpa [#allocation6], 1
    %1921 = vsyncpa [#allocation9], 1
    %1922 = vsyncpa [#allocation4], 1
    %1923 = vsyncpa [#allocation12], 1

</llo_original>
